<compile_context>
chip_gen: v7x
topology: tpu7x:2x2x1
jax: 0.10.0
libtpu: 0.0.40
codegen_flags: <defaults>
</compile_context>

<pallas_src>
import jax
import jax.numpy as jnp
from jax import lax
from jax.experimental import pallas as pl
from jax.experimental.pallas import tpu as pltpu


def _round_up(n, m):
    return ((n + m - 1) // m) * m


def _vmem_cap_bytes():
    """Generation-aware VMEM cap: ~3/4 of physical VMEM.

    v5e/v6e: 128 MiB -> 96 MiB;  v7x: 64 MiB -> 48 MiB.
    """
    try:
        phys = int(pltpu.get_tpu_info().vmem_capacity_bytes)
    except Exception:
        phys = 128 << 20
    return (phys * 3) // 4


def mlp_kernel(x_ref, w0_ref, b0_ref, wh_ref, bh_ref, wf_ref, bf_ref,
               o_ref, h_ref):
    """One batch-tile grid step: runs the ENTIRE MLP for this tile.

      x_ref  : (IN_P, TB)     bf16  input tile (features on sublanes, batch on lanes)
      w0_ref : (U_P, IN_P)    bf16  first Linear weight (torch (out, in) layout)
      b0_ref : (U_P, 1)       f32
      wh_ref : (H, U_P, U_P)  bf16  ALL hidden-layer weights (VMEM resident)
      bh_ref : (H, U_P, 1)    f32
      wf_ref : (U_P, 1)       f32   final Linear weight as a column
      bf_ref : (1, 1)         f32
      o_ref  : (1, TB)        f32   sigmoid output, lane-dense
      h_ref  : (U_P, TB)      bf16  activation carry scratch
    """
    f32 = jnp.float32
    bf16 = jnp.bfloat16

    # Layer 0: Linear(in, U) + ReLU, bf16 MXU inputs, f32 accumulate.
    h0 = jnp.dot(w0_ref[...], x_ref[...], preferred_element_type=f32)
    h_ref[...] = jnp.maximum(h0 + b0_ref[...], 0.0).astype(bf16)

    # Hidden layers: weights are resident; loop is in-kernel (no grid steps).
    num_hidden = wh_ref.shape[0]

    def layer(i, carry):
        hk = jnp.dot(wh_ref[i], h_ref[...], preferred_element_type=f32)
        # Fused bias + ReLU + bf16 downcast into the carry store.
        h_ref[...] = jnp.maximum(hk + bh_ref[i], 0.0).astype(bf16)
        return carry

    if num_hidden <= 8:
        for i in range(num_hidden):      # full static unroll (LLO visibility)
            layer(i, 0)
    else:
        lax.fori_loop(0, num_hidden, layer, 0)

    # Final Linear(U, 1) + Sigmoid: VPU multiply + XLU sublane reduce,
    # lane-dense (1, TB) store.  Elementwise/transcendental kept in f32.
    logits = jnp.sum(h_ref[...].astype(f32) * wf_ref[...], axis=0, keepdims=True)
    o_ref[...] = jax.nn.sigmoid(logits + bf_ref[...])


def prepare_params(params, in_features, units, hidden_layers):
    """One-time pad/cast of torch-layout params into kernel layout.

    Call once at parameter-prep time, NOT inside the per-step forward.
    Padding is exact: padded units get zero weight and zero bias, so ReLU
    keeps them at 0 and they contribute 0 downstream.
    """
    w0, b0, wh, bh, wf, bfb = params
    f32, bf16 = jnp.float32, jnp.bfloat16

    H = max(hidden_layers, 1)
    in_p = _round_up(max(in_features, 1), 16)   # bf16 sublane granularity
    u_p = _round_up(units, 128)

    w0_p = jnp.zeros((u_p, in_p), bf16).at[:units, :in_features].set(w0.astype(bf16))
    b0_p = jnp.zeros((u_p, 1), f32).at[:units, 0].set(b0)
    wh_p = jnp.zeros((H, u_p, u_p), bf16).at[:, :units, :units].set(wh.astype(bf16))
    bh_p = jnp.zeros((H, u_p, 1), f32).at[:, :units, 0].set(bh)
    wf_p = jnp.zeros((u_p, 1), f32).at[:units, 0].set(wf[0])
    bf_p = bfb.reshape(1, 1).astype(f32)
    return w0_p, b0_p, wh_p, bh_p, wf_p, bf_p


def mlp_binary_classifier_forward(x, prepared_params, *, hidden_layers,
                                  batch_tile=512):
    """Pallas forward.  prepared_params comes from prepare_params()."""
    if hidden_layers == 0:
        # Matches the PyTorch module: forward is the identity in this case.
        return x

    w0_p, b0_p, wh_p, bh_p, wf_p, bf_p = prepared_params
    u_p, in_p = w0_p.shape
    H = wh_p.shape[0]
    B, in_features = x.shape
    f32, bf16 = jnp.float32, jnp.bfloat16

    # Batch tiling: large tiles for HBM/MXU efficiency, but keep >= 2 tiles
    # when the batch allows it so v7x's 2 TensorCores both get work.
    tb = _round_up(min(batch_tile, _round_up(B, 128)), 128)
    b_p = _round_up(B, tb)
    n_tiles = b_p // tb
    if n_tiles == 1 and tb > 128:
        tb = _round_up(tb // 2, 128)
        b_p = _round_up(B, tb)
        n_tiles = b_p // tb

    # x: pad + transpose directly in bf16 (no f32 zeros intermediate).
    x_p = jnp.pad(x.astype(bf16).T, ((0, in_p - in_features), (0, b_p - B)))

    # VMEM budget from actual block sizes (x2 for double-buffering) + headroom,
    # capped generation-aware.
    lane = 128
    resident_bytes = (
        u_p * in_p * 2                       # W0 (bf16)
        + u_p * lane * 4                     # b0 (f32, lane-padded)
        + H * u_p * u_p * 2                  # all hidden weights (bf16)
        + H * u_p * lane * 4                 # hidden biases (f32, lane-padded)
        + u_p * lane * 4 + 8 * lane * 4      # Wf, bf
    )
    streamed_bytes = in_p * tb * 2 + 8 * tb * 4   # x tile (bf16) + out tile (f32)
    scratch_bytes = u_p * tb * 2                  # bf16 activation carry
    vmem_needed = 2 * (resident_bytes + streamed_bytes) + scratch_bytes + (8 << 20)
    vmem_limit = int(min(vmem_needed, _vmem_cap_bytes()))

    out = pl.pallas_call(
        mlp_kernel,
        out_shape=jax.ShapeDtypeStruct((1, b_p), f32),
        grid=(n_tiles,),
        in_specs=[
            pl.BlockSpec((in_p, tb), lambda i: (0, i)),         # x tile (streamed)
            pl.BlockSpec((u_p, in_p), lambda i: (0, 0)),        # W0 (resident)
            pl.BlockSpec((u_p, 1), lambda i: (0, 0)),           # b0 (resident)
            pl.BlockSpec((H, u_p, u_p), lambda i: (0, 0, 0)),   # Wh all layers (resident)
            pl.BlockSpec((H, u_p, 1), lambda i: (0, 0, 0)),     # bh all layers (resident)
            pl.BlockSpec((u_p, 1), lambda i: (0, 0)),           # Wf (resident)
            pl.BlockSpec((1, 1), lambda i: (0, 0)),             # bf (resident)
        ],
        out_specs=pl.BlockSpec((1, tb), lambda i: (0, i)),
        scratch_shapes=[pltpu.VMEM((u_p, tb), bf16)],
        compiler_params=pltpu.CompilerParams(
            dimension_semantics=(pltpu.PARALLEL,),
            vmem_limit_bytes=vmem_limit),
    )(x_p, w0_p, b0_p, wh_p, bh_p, wf_p, bf_p)

    return out[0, :B].reshape(B, 1)


def init_params(key, in_features, units, hidden_layers):
    """Deterministic init mimicking torch.nn.Linear's U(-1/sqrt(fan_in), .) scale.

    Weights are in torch (out_features, in_features) layout.
    """
    ks = jax.random.split(key, 6)

    def uni(k, shape, fan_in):
        bound = 1.0 / jnp.sqrt(jnp.float32(fan_in))
        return jax.random.uniform(k, shape, jnp.float32, -bound, bound)

    nh = max(hidden_layers, 1)
    w0 = uni(ks[0], (units, in_features), in_features)
    b0 = uni(ks[1], (units,), in_features)
    wh = uni(ks[2], (nh, units, units), units)
    bh = uni(ks[3], (nh, units), units)
    wf = uni(ks[4], (1, units), units)
    bf = uni(ks[5], (1,), units)
    return w0, b0, wh, bh, wf, bf


def reference_forward(x, params, hidden_layers):
    """Plain-JAX f32 reference (mirrors the PyTorch module exactly)."""
    if hidden_layers == 0:
        return x
    w0, b0, wh, bh, wf, bf = params
    h = jnp.maximum(x @ w0.T + b0, 0.0)
    for i in range(hidden_layers):
        h = jnp.maximum(h @ wh[i].T + bh[i], 0.0)
    return jax.nn.sigmoid(h @ wf.T + bf)


def reference_forward_bf16(x, params, hidden_layers):
    """Reference mirroring the kernel's bf16-matmul / bf16-carry numerics."""
    if hidden_layers == 0:
        return x
    w0, b0, wh, bh, wf, bf = params
    bf16 = jnp.bfloat16
    h = jnp.dot(x.astype(bf16), w0.T.astype(bf16),
                preferred_element_type=jnp.float32)
    h = jnp.maximum(h + b0, 0.0).astype(bf16)
    for i in range(hidden_layers):
        h = jnp.dot(h, wh[i].T.astype(bf16),
                    preferred_element_type=jnp.float32)
        h = jnp.maximum(h + bh[i], 0.0).astype(bf16)
    logits = jnp.sum(h.astype(jnp.float32) * wf[0][None, :], axis=-1,
                     keepdims=True) + bf
    return jax.nn.sigmoid(logits)


if __name__ == "__main__":
    key = jax.random.PRNGKey(0)
    k_x, k_p = jax.random.split(key)

    batch = 256              # -> 2 batch tiles of 128: exercises the parallel grid
    in_features = 16
    units_per_layer = 32
    hidden_layers = 2

    x = jax.random.normal(k_x, (batch, in_features), jnp.float32)
    params = init_params(k_p, in_features, units_per_layer, hidden_layers)

    # One-time parameter prep (outside the per-step forward).
    prepared = prepare_params(params, in_features, units_per_layer, hidden_layers)

    fwd = jax.jit(mlp_binary_classifier_forward,
                  static_argnames=("hidden_layers", "batch_tile"))
    out = fwd(x, prepared, hidden_layers=hidden_layers)
    out = jax.block_until_ready(out)

    assert out.shape == (batch, 1), out.shape

    ref_bf16 = reference_forward_bf16(x, params, hidden_layers)
    ref_f32 = reference_forward(x, params, hidden_layers)
    assert jnp.allclose(out, ref_bf16, atol=2e-3, rtol=2e-3), \
        float(jnp.max(jnp.abs(out - ref_bf16)))
    assert jnp.allclose(out, ref_f32, atol=3e-2, rtol=3e-2), \
        float(jnp.max(jnp.abs(out - ref_f32)))

    print("KERNEL_OK")
</pallas_src>

<mosaic_0001>
module attributes {stable_mosaic.version = 11 : i64} {
  func.func @mlp_kernel(%arg0: i32, %arg1: memref<16x128xbf16, #tpu.memory_space<vmem>>, %arg2: memref<128x16xbf16, #tpu.memory_space<vmem>>, %arg3: memref<128x1xf32, #tpu.memory_space<vmem>>, %arg4: memref<2x128x128xbf16, #tpu.memory_space<vmem>>, %arg5: memref<2x128x1xf32, #tpu.memory_space<vmem>>, %arg6: memref<128x1xf32, #tpu.memory_space<vmem>>, %arg7: memref<1x1xf32, #tpu.memory_space<vmem>>, %arg8: memref<1x128xf32, #tpu.memory_space<vmem>>, %arg9: memref<128x128xbf16, #tpu.memory_space<vmem>>) attributes {dimension_semantics = [#tpu.dimension_semantics<parallel>], iteration_bounds = array<i64: 2>, scalar_prefetch = 0 : i64, scratch_operands = 1 : i64, tpu.core_type = #tpu.core_type<tc>, window_params = [{transform_indices = @transform_0, window_bounds = array<i64: 16, 128>}, {pipeline_mode = #tpu.pipeline_mode<synchronous>, transform_indices = @transform_1, window_bounds = array<i64: 128, 16>}, {pipeline_mode = #tpu.pipeline_mode<synchronous>, transform_indices = @transform_2, window_bounds = array<i64: 128, 1>}, {pipeline_mode = #tpu.pipeline_mode<synchronous>, transform_indices = @transform_3, window_bounds = array<i64: 2, 128, 128>}, {pipeline_mode = #tpu.pipeline_mode<synchronous>, transform_indices = @transform_4, window_bounds = array<i64: 2, 128, 1>}, {pipeline_mode = #tpu.pipeline_mode<synchronous>, transform_indices = @transform_5, window_bounds = array<i64: 128, 1>}, {pipeline_mode = #tpu.pipeline_mode<synchronous>, transform_indices = @transform_6, window_bounds = array<i64: 1, 1>}, {transform_indices = @transform_7, window_bounds = array<i64: 1, 128>}]} {
    %c0 = arith.constant 0 : index
    %c0_0 = arith.constant 0 : index
    %0 = vector.load %arg2[%c0, %c0_0] : memref<128x16xbf16, #tpu.memory_space<vmem>>, vector<128x16xbf16>
    %c0_1 = arith.constant 0 : index
    %c0_2 = arith.constant 0 : index
    %1 = vector.load %arg1[%c0_1, %c0_2] : memref<16x128xbf16, #tpu.memory_space<vmem>>, vector<16x128xbf16>
    %cst = arith.constant dense<0.000000e+00> : vector<128x128xf32>
    %2 = tpu.matmul %0, %1, %cst {dimension_numbers = #tpu.dot_dimension_numbers<[1], [0], [0], [1], [0, 0, 1, 1], [], []>} : vector<128x16xbf16>, vector<16x128xbf16>, vector<128x128xf32> -> vector<128x128xf32>
    %c0_3 = arith.constant 0 : index
    %c0_4 = arith.constant 0 : index
    %3 = vector.load %arg3[%c0_3, %c0_4] : memref<128x1xf32, #tpu.memory_space<vmem>>, vector<128x1xf32>
    %4 = vector.broadcast %3 : vector<128x1xf32> to vector<128x128xf32>
    %5 = arith.addf %2, %4 : vector<128x128xf32>
    %cst_5 = arith.constant 0.000000e+00 : f32
    %6 = vector.broadcast %cst_5 : f32 to vector<128x128xf32>
    %7 = arith.maximumf %5, %6 : vector<128x128xf32>
    %8 = arith.truncf %7 : vector<128x128xf32> to vector<128x128xbf16>
    %c0_6 = arith.constant 0 : index
    %c0_7 = arith.constant 0 : index
    %9 = vector.load %arg9[%c0_6, %c0_7] : memref<128x128xbf16, #tpu.memory_space<vmem>>, vector<128x128xbf16>
    tpu.vector_store %arg9[%c0_6, %c0_7], %8 {strides = array<i32>} : memref<128x128xbf16, #tpu.memory_space<vmem>>, vector<128x128xbf16>,
    %c0_8 = arith.constant 0 : index
    %c0_9 = arith.constant 0 : index
    %c0_10 = arith.constant 0 : index
    %10 = vector.load %arg4[%c0_8, %c0_9, %c0_10] : memref<2x128x128xbf16, #tpu.memory_space<vmem>>, vector<1x128x128xbf16>
    %11 = vector.shape_cast %10 : vector<1x128x128xbf16> to vector<128x128xbf16>
    %c0_11 = arith.constant 0 : index
    %c0_12 = arith.constant 0 : index
    %12 = vector.load %arg9[%c0_11, %c0_12] : memref<128x128xbf16, #tpu.memory_space<vmem>>, vector<128x128xbf16>
    %cst_13 = arith.constant dense<0.000000e+00> : vector<128x128xf32>
    %13 = tpu.matmul %11, %12, %cst_13 {dimension_numbers = #tpu.dot_dimension_numbers<[1], [0], [0], [1], [0, 0, 1, 1], [], []>} : vector<128x128xbf16>, vector<128x128xbf16>, vector<128x128xf32> -> vector<128x128xf32>
    %c0_14 = arith.constant 0 : index
    %c0_15 = arith.constant 0 : index
    %c0_16 = arith.constant 0 : index
    %14 = vector.load %arg5[%c0_14, %c0_15, %c0_16] : memref<2x128x1xf32, #tpu.memory_space<vmem>>, vector<1x128x1xf32>
    %15 = vector.shape_cast %14 : vector<1x128x1xf32> to vector<128x1xf32>
    %16 = vector.broadcast %15 : vector<128x1xf32> to vector<128x128xf32>
    %17 = arith.addf %13, %16 : vector<128x128xf32>
    %cst_17 = arith.constant 0.000000e+00 : f32
    %18 = vector.broadcast %cst_17 : f32 to vector<128x128xf32>
    %19 = arith.maximumf %17, %18 : vector<128x128xf32>
    %20 = arith.truncf %19 : vector<128x128xf32> to vector<128x128xbf16>
    %c0_18 = arith.constant 0 : index
    %c0_19 = arith.constant 0 : index
    %21 = vector.load %arg9[%c0_18, %c0_19] : memref<128x128xbf16, #tpu.memory_space<vmem>>, vector<128x128xbf16>
    tpu.vector_store %arg9[%c0_18, %c0_19], %20 {strides = array<i32>} : memref<128x128xbf16, #tpu.memory_space<vmem>>, vector<128x128xbf16>,
    %c1 = arith.constant 1 : index
    %c0_20 = arith.constant 0 : index
    %c0_21 = arith.constant 0 : index
    %22 = vector.load %arg4[%c1, %c0_20, %c0_21] : memref<2x128x128xbf16, #tpu.memory_space<vmem>>, vector<1x128x128xbf16>
    %23 = vector.shape_cast %22 : vector<1x128x128xbf16> to vector<128x128xbf16>
    %c0_22 = arith.constant 0 : index
    %c0_23 = arith.constant 0 : index
    %24 = vector.load %arg9[%c0_22, %c0_23] : memref<128x128xbf16, #tpu.memory_space<vmem>>, vector<128x128xbf16>
    %cst_24 = arith.constant dense<0.000000e+00> : vector<128x128xf32>
    %25 = tpu.matmul %23, %24, %cst_24 {dimension_numbers = #tpu.dot_dimension_numbers<[1], [0], [0], [1], [0, 0, 1, 1], [], []>} : vector<128x128xbf16>, vector<128x128xbf16>, vector<128x128xf32> -> vector<128x128xf32>
    %c1_25 = arith.constant 1 : index
    %c0_26 = arith.constant 0 : index
    %c0_27 = arith.constant 0 : index
    %26 = vector.load %arg5[%c1_25, %c0_26, %c0_27] : memref<2x128x1xf32, #tpu.memory_space<vmem>>, vector<1x128x1xf32>
    %27 = vector.shape_cast %26 : vector<1x128x1xf32> to vector<128x1xf32>
    %28 = vector.broadcast %27 : vector<128x1xf32> to vector<128x128xf32>
    %29 = arith.addf %25, %28 : vector<128x128xf32>
    %cst_28 = arith.constant 0.000000e+00 : f32
    %30 = vector.broadcast %cst_28 : f32 to vector<128x128xf32>
    %31 = arith.maximumf %29, %30 : vector<128x128xf32>
    %32 = arith.truncf %31 : vector<128x128xf32> to vector<128x128xbf16>
    %c0_29 = arith.constant 0 : index
    %c0_30 = arith.constant 0 : index
    %33 = vector.load %arg9[%c0_29, %c0_30] : memref<128x128xbf16, #tpu.memory_space<vmem>>, vector<128x128xbf16>
    tpu.vector_store %arg9[%c0_29, %c0_30], %32 {strides = array<i32>} : memref<128x128xbf16, #tpu.memory_space<vmem>>, vector<128x128xbf16>,
    %c0_31 = arith.constant 0 : index
    %c0_32 = arith.constant 0 : index
    %34 = vector.load %arg9[%c0_31, %c0_32] : memref<128x128xbf16, #tpu.memory_space<vmem>>, vector<128x128xbf16>
    %35 = arith.extf %34 : vector<128x128xbf16> to vector<128x128xf32>
    %c0_33 = arith.constant 0 : index
    %c0_34 = arith.constant 0 : index
    %36 = vector.load %arg6[%c0_33, %c0_34] : memref<128x1xf32, #tpu.memory_space<vmem>>, vector<128x1xf32>
    %37 = vector.broadcast %36 : vector<128x1xf32> to vector<128x128xf32>
    %38 = arith.mulf %35, %37 : vector<128x128xf32>
    %cst_35 = arith.constant dense<0.000000e+00> : vector<128xf32>
    %39 = vector.multi_reduction <add>, %38, %cst_35 [0] : vector<128x128xf32> to vector<128xf32>
    %40 = vector.shape_cast %39 : vector<128xf32> to vector<1x128xf32>
    %c0_36 = arith.constant 0 : index
    %c0_37 = arith.constant 0 : index
    %41 = vector.load %arg7[%c0_36, %c0_37] : memref<1x1xf32, #tpu.memory_space<vmem>>, vector<1x1xf32>
    %42 = vector.broadcast %41 : vector<1x1xf32> to vector<1x128xf32>
    %43 = arith.addf %40, %42 : vector<1x128xf32>
    %44 = arith.negf %43 : vector<1x128xf32>
    %45 = math.exp %44 : vector<1x128xf32>
    %cst_38 = arith.constant 1.000000e+00 : f32
    %46 = vector.broadcast %cst_38 : f32 to vector<1x128xf32>
    %47 = arith.addf %46, %45 : vector<1x128xf32>
    %48 = arith.divf %46, %47 : vector<1x128xf32>
    %c0_39 = arith.constant 0 : index
    %c0_40 = arith.constant 0 : index
    %49 = vector.load %arg8[%c0_39, %c0_40] : memref<1x128xf32, #tpu.memory_space<vmem>>, vector<1x128xf32>
    tpu.vector_store %arg8[%c0_39, %c0_40], %48 {strides = array<i32>} : memref<1x128xf32, #tpu.memory_space<vmem>>, vector<1x128xf32>,
    return
  }
  func.func @transform_0(%arg0: i32) -> (i32, i32) {
    %c0_i32 = arith.constant 0 : i32
    %c0_i32_0 = arith.constant 0 : i32
    return %c0_i32, %arg0 : i32, i32
  }
  func.func @transform_1(%arg0: i32) -> (i32, i32) {
    %c0_i32 = arith.constant 0 : i32
    %c0_i32_0 = arith.constant 0 : i32
    %c0_i32_1 = arith.constant 0 : i32
    return %c0_i32, %c0_i32_0 : i32, i32
  }
  func.func @transform_2(%arg0: i32) -> (i32, i32) {
    %c0_i32 = arith.constant 0 : i32
    %c0_i32_0 = arith.constant 0 : i32
    %c0_i32_1 = arith.constant 0 : i32
    return %c0_i32, %c0_i32_0 : i32, i32
  }
  func.func @transform_3(%arg0: i32) -> (i32, i32, i32) {
    %c0_i32 = arith.constant 0 : i32
    %c0_i32_0 = arith.constant 0 : i32
    %c0_i32_1 = arith.constant 0 : i32
    %c0_i32_2 = arith.constant 0 : i32
    return %c0_i32, %c0_i32_0, %c0_i32_1 : i32, i32, i32
  }
  func.func @transform_4(%arg0: i32) -> (i32, i32, i32) {
    %c0_i32 = arith.constant 0 : i32
    %c0_i32_0 = arith.constant 0 : i32
    %c0_i32_1 = arith.constant 0 : i32
    %c0_i32_2 = arith.constant 0 : i32
    return %c0_i32, %c0_i32_0, %c0_i32_1 : i32, i32, i32
  }
  func.func @transform_5(%arg0: i32) -> (i32, i32) {
    %c0_i32 = arith.constant 0 : i32
    %c0_i32_0 = arith.constant 0 : i32
    %c0_i32_1 = arith.constant 0 : i32
    return %c0_i32, %c0_i32_0 : i32, i32
  }
  func.func @transform_6(%arg0: i32) -> (i32, i32) {
    %c0_i32 = arith.constant 0 : i32
    %c0_i32_0 = arith.constant 0 : i32
    %c0_i32_1 = arith.constant 0 : i32
    return %c0_i32, %c0_i32_0 : i32, i32
  }
  func.func @transform_7(%arg0: i32) -> (i32, i32) {
    %c0_i32 = arith.constant 0 : i32
    %c0_i32_0 = arith.constant 0 : i32
    return %c0_i32, %arg0 : i32, i32
  }
}

</mosaic_0001>

<llo_original>
// kernel: mlp_binary_classifier_forward.1
$region0: #{mlp_binary_classifier_forward.1}
  #allocation0 [shape = 'u32[]', space=smem, size = 0x4, offset = 0x4, fixed_abs, tag = 'smem constant byte address 0x4 - core index']
  #allocation1 [shape = 'u32[144,128]{1,0:T(1,128)}', space=vmem, size = 0x12000, scoped, tag = 'internal scratch']
  #allocation2 [shape = 'bf16[128,128]{1,0:T(16,128)(2,1)}', space=vmem, size = 0x8000, scoped, tag = 'scratch operand']
  #allocation3 [shape = 'f32[1,1]{1,0:T(1,128)S(1)}', space=vmem, size = 0x200, scoped, tag = 'scoped memory for mlp_binary_classifier_forward.1']
  %s0 = inlined_call_operand.vmem [shape: bf16[16,256], index: 0, kind: input, shape index: {}]
  %s1 = inlined_call_operand.vmem [shape: bf16[128,16], index: 1, kind: input, shape index: {}]
  %s2 = inlined_call_operand.vmem [shape: f32[128,1], index: 2, kind: input, shape index: {}]
  %s3 = inlined_call_operand.vmem [shape: bf16[2,128,128], index: 3, kind: input, shape index: {}]
  %s4 = inlined_call_operand.vmem [shape: f32[2,128,1], index: 4, kind: input, shape index: {}]
  %s5 = inlined_call_operand.vmem [shape: f32[128,1], index: 5, kind: input, shape index: {}]
  %s6 = inlined_call_operand.<no memory space> [shape: f32[1,1], index: 6, kind: input, shape index: {}]
  %s7 = inlined_call_operand.hbm [shape: f32[1,256], index: 7, kind: output, shape index: {}]
  %s8 = sld [smem:[#allocation0]]
  $region102: #{mlp_binary_classifier_forward.1} parent=0
    _
  %s10 = ssub.s32 1, %s8
  %s11 = scalar_select 0, %s10, %s8
  %v12 = vstv %s6
  %13 = vst [vmem:[#allocation3] sm:$0x1] %v12
  $region1: #{mlp_binary_classifier_forward.1} parent=0
    #allocation4 [shape = 'u8[8192]{0}', space=vmem, size = 0x2000, scoped, tag = 'input window, operand 0']
    #allocation5 [shape = 'u8[1024]{0}', space=vmem, size = 0x400, scoped, tag = 'output window, operand 0']
    #allocation6 [shape = 's32[2]{0}', space=sflag, size = 0x8, scoped, tag = 'scoped memory for mlp_binary_classifier_forward.1']
    %14 = vsyncpa [#allocation6], 0
    %s15 = scalar_lea.sflag [#allocation6], 1
    %16 = vsyncpa %s15, 0
    loop: start=0, step=1, limit=4
    $region2: #{mlp_binary_classifier_forward.1} parent=1 // loop_pre_header
      _
    $region3: #{mlp_binary_classifier_forward.1} parent=1 // loop_header
      %s18 = sphi 0, %s22
      %p19 = scmp.ge.s32.totalorder %s18, 4
      %s28 = sphi 0, %s30
      %s31 = sphi 0, %s28
      %s32 = sphi 0, %s31
      %s48 = sphi 0, %s32
      %s52 = sphi 0, %s52
      %s54 = sphi 0, %s52
      %s55 = sphi 0, %s54
      %s69 = sphi 0, %s55
      %s73 = sphi 0, %s73
      %s75 = sphi 0, %s73
      %s76 = sphi 0, %s75
      %s90 = sphi 0, %s76
      %s94 = sphi 0, %s94
      %s96 = sphi 0, %s94
      %s97 = sphi 0, %s96
      %s111 = sphi 0, %s97
      %s115 = sphi 0, %s115
      %s117 = sphi 0, %s115
      %s118 = sphi 0, %s117
      %s132 = sphi 0, %s118
      %s136 = sphi 0, %s136
      %s138 = sphi 0, %s136
      %s139 = sphi 0, %s138
      %s153 = sphi 0, %s139
      %s157 = sphi 0, %s157
      %s159 = sphi 0, %s157
      %s160 = sphi 0, %s159
      %s174 = sphi 0, %s160
      %s180 = sphi 0, %s182
      %s183 = sphi 0, %s180
      %s184 = sphi 0, %s183
      %s200 = sphi 0, %s184
    $region4: #{mlp_binary_classifier_forward.1} parent=1 // loop_header_branch
      %21 = sbr.rel (%p19) target = $region8
    $region5: #{mlp_binary_classifier_forward.1} parent=1 // loop_body
      %s23 = ssub.s32 %s18, 1
      %s24 = ssub.s32 %s18, 2
      %s25 = sadd.s32 %s18, 1
      %s26 = ssub.s32 %s18, %s25
      %p27 = scmp.eq.s32.totalorder %s26, 0
      %s29 = sadd.s32 %s28, 1
      %s30 = scalar_select %p27, %s28, %s29
      %p33 = pneg %p27
      %p34 = scmp.eq.s32.totalorder %s18, 1
      %p35 = por %p33, %p34
      %p36 = scmp.ne.s32.totalorder %s28, %s31
      %p37 = scmp.eq.s32.totalorder %s18, 0
      %p38 = por %p36, %p37
      %p39 = scmp.ne.s32.totalorder %s28, %s31
      %p40 = scmp.eq.s32.totalorder %s23, 1
      %p41 = por %p39, %p40
      %p42 = scmp.ne.s32.totalorder %s31, %s32
      %p43 = scmp.eq.s32.totalorder %s23, 0
      %p44 = por %p42, %p43
      %p45 = scmp.ne.s32.totalorder %s31, %s32
      %p46 = scmp.eq.s32.totalorder %s24, 1
      %p47 = por %p45, %p46
      %p49 = scmp.ne.s32.totalorder %s32, %s48
      %p50 = scmp.eq.s32.totalorder %s24, 0
      %p51 = por %p49, %p50
      %s53 = sadd.s32 %s52, 1
      %p56 = scmp.eq.s32.totalorder %s18, 1
      %p57 = scmp.ne.s32.totalorder %s52, %s54
      %p58 = scmp.eq.s32.totalorder %s18, 0
      %p59 = por %p57, %p58
      %p60 = scmp.ne.s32.totalorder %s52, %s54
      %p61 = scmp.eq.s32.totalorder %s23, 1
      %p62 = por %p60, %p61
      %p63 = scmp.ne.s32.totalorder %s54, %s55
      %p64 = scmp.eq.s32.totalorder %s23, 0
      %p65 = por %p63, %p64
      %p66 = scmp.ne.s32.totalorder %s54, %s55
      %p67 = scmp.eq.s32.totalorder %s24, 1
      %p68 = por %p66, %p67
      %p70 = scmp.ne.s32.totalorder %s55, %s69
      %p71 = scmp.eq.s32.totalorder %s24, 0
      %p72 = por %p70, %p71
      %s74 = sadd.s32 %s73, 1
      %p77 = scmp.eq.s32.totalorder %s18, 1
      %p78 = scmp.ne.s32.totalorder %s73, %s75
      %p79 = scmp.eq.s32.totalorder %s18, 0
      %p80 = por %p78, %p79
      %p81 = scmp.ne.s32.totalorder %s73, %s75
      %p82 = scmp.eq.s32.totalorder %s23, 1
      %p83 = por %p81, %p82
      %p84 = scmp.ne.s32.totalorder %s75, %s76
      %p85 = scmp.eq.s32.totalorder %s23, 0
      %p86 = por %p84, %p85
      %p87 = scmp.ne.s32.totalorder %s75, %s76
      %p88 = scmp.eq.s32.totalorder %s24, 1
      %p89 = por %p87, %p88
      %p91 = scmp.ne.s32.totalorder %s76, %s90
      %p92 = scmp.eq.s32.totalorder %s24, 0
      %p93 = por %p91, %p92
      %s95 = sadd.s32 %s94, 1
      %p98 = scmp.eq.s32.totalorder %s18, 1
      %p99 = scmp.ne.s32.totalorder %s94, %s96
      %p100 = scmp.eq.s32.totalorder %s18, 0
      %p101 = por %p99, %p100
      %p102 = scmp.ne.s32.totalorder %s94, %s96
      %p103 = scmp.eq.s32.totalorder %s23, 1
      %p104 = por %p102, %p103
      %p105 = scmp.ne.s32.totalorder %s96, %s97
      %p106 = scmp.eq.s32.totalorder %s23, 0
      %p107 = por %p105, %p106
      %p108 = scmp.ne.s32.totalorder %s96, %s97
      %p109 = scmp.eq.s32.totalorder %s24, 1
      %p110 = por %p108, %p109
      %p112 = scmp.ne.s32.totalorder %s97, %s111
      %p113 = scmp.eq.s32.totalorder %s24, 0
      %p114 = por %p112, %p113
      %s116 = sadd.s32 %s115, 1
      %p119 = scmp.eq.s32.totalorder %s18, 1
      %p120 = scmp.ne.s32.totalorder %s115, %s117
      %p121 = scmp.eq.s32.totalorder %s18, 0
      %p122 = por %p120, %p121
      %p123 = scmp.ne.s32.totalorder %s115, %s117
      %p124 = scmp.eq.s32.totalorder %s23, 1
      %p125 = por %p123, %p124
      %p126 = scmp.ne.s32.totalorder %s117, %s118
      %p127 = scmp.eq.s32.totalorder %s23, 0
      %p128 = por %p126, %p127
      %p129 = scmp.ne.s32.totalorder %s117, %s118
      %p130 = scmp.eq.s32.totalorder %s24, 1
      %p131 = por %p129, %p130
      %p133 = scmp.ne.s32.totalorder %s118, %s132
      %p134 = scmp.eq.s32.totalorder %s24, 0
      %p135 = por %p133, %p134
      %s137 = sadd.s32 %s136, 1
      %p140 = scmp.eq.s32.totalorder %s18, 1
      %p141 = scmp.ne.s32.totalorder %s136, %s138
      %p142 = scmp.eq.s32.totalorder %s18, 0
      %p143 = por %p141, %p142
      %p144 = scmp.ne.s32.totalorder %s136, %s138
      %p145 = scmp.eq.s32.totalorder %s23, 1
      %p146 = por %p144, %p145
      %p147 = scmp.ne.s32.totalorder %s138, %s139
      %p148 = scmp.eq.s32.totalorder %s23, 0
      %p149 = por %p147, %p148
      %p150 = scmp.ne.s32.totalorder %s138, %s139
      %p151 = scmp.eq.s32.totalorder %s24, 1
      %p152 = por %p150, %p151
      %p154 = scmp.ne.s32.totalorder %s139, %s153
      %p155 = scmp.eq.s32.totalorder %s24, 0
      %p156 = por %p154, %p155
      %s158 = sadd.s32 %s157, 1
      %p161 = scmp.eq.s32.totalorder %s18, 1
      %p162 = scmp.ne.s32.totalorder %s157, %s159
      %p163 = scmp.eq.s32.totalorder %s18, 0
      %p164 = por %p162, %p163
      %p165 = scmp.ne.s32.totalorder %s157, %s159
      %p166 = scmp.eq.s32.totalorder %s23, 1
      %p167 = por %p165, %p166
      %p168 = scmp.ne.s32.totalorder %s159, %s160
      %p169 = scmp.eq.s32.totalorder %s23, 0
      %p170 = por %p168, %p169
      %p171 = scmp.ne.s32.totalorder %s159, %s160
      %p172 = scmp.eq.s32.totalorder %s24, 1
      %p173 = por %p171, %p172
      %p175 = scmp.ne.s32.totalorder %s160, %s174
      %p176 = scmp.eq.s32.totalorder %s24, 0
      %p177 = por %p175, %p176
      %s178 = ssub.s32 %s18, %s25
      %p179 = scmp.eq.s32.totalorder %s178, 0
      %s181 = sadd.s32 %s180, 1
      %s182 = scalar_select %p179, %s180, %s181
      %p185 = pneg %p179
      %p186 = scmp.eq.s32.totalorder %s18, 1
      %p187 = por %p185, %p186
      %p188 = scmp.ne.s32.totalorder %s180, %s183
      %p189 = scmp.eq.s32.totalorder %s18, 0
      %p190 = por %p188, %p189
      %p191 = scmp.ne.s32.totalorder %s180, %s183
      %p192 = scmp.eq.s32.totalorder %s23, 1
      %p193 = por %p191, %p192
      %p194 = scmp.ne.s32.totalorder %s183, %s184
      %p195 = scmp.eq.s32.totalorder %s23, 0
      %p196 = por %p194, %p195
      %p197 = scmp.ne.s32.totalorder %s183, %s184
      %p198 = scmp.eq.s32.totalorder %s24, 1
      %p199 = por %p197, %p198
      %p201 = scmp.ne.s32.totalorder %s184, %s200
      %p202 = scmp.eq.s32.totalorder %s24, 0
      %p203 = por %p201, %p202
      %p204 = scmp.le.s32.totalorder 1, %s18
      %p205 = scmp.lt.s32.totalorder %s18, 3
      %p206 = pnand %p204, %p205
      %p207 = pneg %p206
      // Predicated region
      $region9: #{mlp_binary_classifier_forward.1} parent=5 // pred_check
        _
      $region10: #{mlp_binary_classifier_forward.1} parent=5 // pred_check_branch
        %209 = sbr.rel (%p206) target = $region12
      $region11: #{mlp_binary_classifier_forward.1} parent=5 // pred_region
        %s210 = ssub.s32 %s18, 1
        // Predicated region
        $region13: #{mlp_binary_classifier_forward.1} parent=11 // pred_check
          %p211 = pneg %p65
        $region14: #{mlp_binary_classifier_forward.1} parent=11 // pred_check_branch
          %213 = sbr.rel (%p211) target = $region16
        $region15: #{mlp_binary_classifier_forward.1} parent=11 // pred_region
          _
        $region16: #{mlp_binary_classifier_forward.1} parent=11 // pred_fallthru
          _
        // Predicated region
        $region17: #{mlp_binary_classifier_forward.1} parent=11 // pred_check
          %p214 = pneg %p86
        $region18: #{mlp_binary_classifier_forward.1} parent=11 // pred_check_branch
          %216 = sbr.rel (%p214) target = $region20
        $region19: #{mlp_binary_classifier_forward.1} parent=11 // pred_region
          _
        $region20: #{mlp_binary_classifier_forward.1} parent=11 // pred_fallthru
          _
        // Predicated region
        $region21: #{mlp_binary_classifier_forward.1} parent=11 // pred_check
          %p217 = pneg %p107
        $region22: #{mlp_binary_classifier_forward.1} parent=11 // pred_check_branch
          %219 = sbr.rel (%p217) target = $region24
        $region23: #{mlp_binary_classifier_forward.1} parent=11 // pred_region
          _
        $region24: #{mlp_binary_classifier_forward.1} parent=11 // pred_fallthru
          _
        // Predicated region
        $region25: #{mlp_binary_classifier_forward.1} parent=11 // pred_check
          %p220 = pneg %p128
        $region26: #{mlp_binary_classifier_forward.1} parent=11 // pred_check_branch
          %222 = sbr.rel (%p220) target = $region28
        $region27: #{mlp_binary_classifier_forward.1} parent=11 // pred_region
          _
        $region28: #{mlp_binary_classifier_forward.1} parent=11 // pred_fallthru
          _
        // Predicated region
        $region29: #{mlp_binary_classifier_forward.1} parent=11 // pred_check
          %p223 = pneg %p149
        $region30: #{mlp_binary_classifier_forward.1} parent=11 // pred_check_branch
          %225 = sbr.rel (%p223) target = $region32
        $region31: #{mlp_binary_classifier_forward.1} parent=11 // pred_region
          _
        $region32: #{mlp_binary_classifier_forward.1} parent=11 // pred_fallthru
          _
        // Predicated region
        $region33: #{mlp_binary_classifier_forward.1} parent=11 // pred_check
          %p226 = pneg %p170
        $region34: #{mlp_binary_classifier_forward.1} parent=11 // pred_check_branch
          %228 = sbr.rel (%p226) target = $region36
        $region35: #{mlp_binary_classifier_forward.1} parent=11 // pred_region
          _
        $region36: #{mlp_binary_classifier_forward.1} parent=11 // pred_fallthru
          _
      $region12: #{mlp_binary_classifier_forward.1} parent=5 // pred_fallthru
        _
      %p229 = scmp.lt.s32.totalorder %s18, 2
      // Predicated region
      $region37: #{mlp_binary_classifier_forward.1} parent=5 // pred_check
        %p230 = pneg %p229
      $region38: #{mlp_binary_classifier_forward.1} parent=5 // pred_check_branch
        %232 = sbr.rel (%p230) target = $region40
      $region39: #{mlp_binary_classifier_forward.1} parent=5 // pred_region
        // Predicated region
        $region41: #{mlp_binary_classifier_forward.1} parent=39 // pred_check
          %p233 = pneg %p38
        $region42: #{mlp_binary_classifier_forward.1} parent=39 // pred_check_branch
          %235 = sbr.rel (%p233) target = $region44
        $region43: #{mlp_binary_classifier_forward.1} parent=39 // pred_region
          %s236 = sand.u32 %s28, 1
          %s237 = sand.u32 %s28, 1
          %s238 = smul.addr %s237, 8
          %s239 = scalar_lea.vmem [#allocation4], %s238
          %s240 = smul.addr %s18, 4
          %s241 = scalar_lea.vmem %s0, %s240
          // Predicated region
          $region45: #{mlp_binary_classifier_forward.1} parent=43 // pred_check
            _
          $region46: #{mlp_binary_classifier_forward.1} parent=43 // pred_check_branch
            %243 = sbr.rel (0) target = $region48
          $region47: #{mlp_binary_classifier_forward.1} parent=43 // pred_region
            // Predicated region
            $region49: #{mlp_binary_classifier_forward.1} parent=47 // pred_check
              _
            $region50: #{mlp_binary_classifier_forward.1} parent=47 // pred_check_branch
              %245 = sbr.rel target = $region52
            $region51: #{mlp_binary_classifier_forward.1} parent=47 // pred_region
              // Predicated region
              $region64: #{mlp_binary_classifier_forward.1} parent=51 // pred_check
                _
              $region65: #{mlp_binary_classifier_forward.1} parent=51 // pred_check_branch
                %262 = sbr.rel (0) target = $region67
              $region66: #{mlp_binary_classifier_forward.1} parent=51 // pred_region
                loop: start=0, step=1, limit=1
                $region68: #{mlp_binary_classifier_forward.1} parent=66 // loop_pre_header
                  _
                $region69: #{mlp_binary_classifier_forward.1} parent=66 // loop_header
                  %s264 = sphi 0, %s268
                  %p265 = scmp.ge.s32.totalorder %s264, 1
                  %s269 = sphi %s241, %s241
                  %s270 = sphi %s239, %s239
                $region70: #{mlp_binary_classifier_forward.1} parent=66 // loop_header_branch
                  %267 = sbr.rel (%p265) target = $region74
                $region71: #{mlp_binary_classifier_forward.1} parent=66 // loop_body
                  _
                $region72: #{mlp_binary_classifier_forward.1} parent=66 // loop_footer
                  %s268 = sadd.s32 1, %s264
                $region73: #{mlp_binary_classifier_forward.1} parent=66 // loop_footer_branch
                  %263 = sbr.rel target = $region69
                $region74: #{mlp_binary_classifier_forward.1} parent=66 // loop_exit
                  _
                loop: start=0, step=1, limit=1
                $region75: #{mlp_binary_classifier_forward.1} parent=66 // loop_pre_header
                  _
                $region76: #{mlp_binary_classifier_forward.1} parent=66 // loop_header
                  %s273 = sphi 0, %s277
                  %p274 = scmp.ge.s32.totalorder %s273, 1
                  %s278 = sphi %s241, %s241
                  %s279 = sphi %s239, %s239
                $region77: #{mlp_binary_classifier_forward.1} parent=66 // loop_header_branch
                  %276 = sbr.rel (%p274) target = $region81
                $region78: #{mlp_binary_classifier_forward.1} parent=66 // loop_body
                  %v280 = vld [vmem:[%s278] sm:$0xf]
                  %281 = vst [vmem:[%s279] sm:$0xf] %v280
                  %v282 = vld [vmem:[%s278 + $0x8] sm:$0xf]
                  %283 = vst [vmem:[%s279 + $0x4] sm:$0xf] %v282
                $region79: #{mlp_binary_classifier_forward.1} parent=66 // loop_footer
                  %s277 = sadd.s32 1, %s273
                $region80: #{mlp_binary_classifier_forward.1} parent=66 // loop_footer_branch
                  %272 = sbr.rel target = $region76
                $region81: #{mlp_binary_classifier_forward.1} parent=66 // loop_exit
                  _
              $region67: #{mlp_binary_classifier_forward.1} parent=51 // pred_fallthru
                _
            $region52: #{mlp_binary_classifier_forward.1} parent=47 // pred_fallthru
              _
            // Predicated region
            $region53: #{mlp_binary_classifier_forward.1} parent=47 // pred_check
              _
            $region54: #{mlp_binary_classifier_forward.1} parent=47 // pred_check_branch
              %247 = sbr.rel (0) target = $region56
            $region55: #{mlp_binary_classifier_forward.1} parent=47 // pred_region
              loop: start=0, step=1, limit=1
              $region57: #{mlp_binary_classifier_forward.1} parent=55 // loop_pre_header
                _
              $region58: #{mlp_binary_classifier_forward.1} parent=55 // loop_header
                %s250 = sphi 0, %s254
                %p251 = scmp.ge.s32.totalorder %s250, 1
                %s255 = sphi %s241, %s241
                %s256 = sphi %s239, %s239
              $region59: #{mlp_binary_classifier_forward.1} parent=55 // loop_header_branch
                %253 = sbr.rel (%p251) target = $region63
              $region60: #{mlp_binary_classifier_forward.1} parent=55 // loop_body
                %v257 = vld [vmem:[%s255] sm:$0xf]
                %258 = vst [vmem:[%s256] sm:$0xf] %v257
                %v259 = vld [vmem:[%s255 + $0x8] sm:$0xf]
                %260 = vst [vmem:[%s256 + $0x4] sm:$0xf] %v259
              $region61: #{mlp_binary_classifier_forward.1} parent=55 // loop_footer
                %s254 = sadd.s32 1, %s250
              $region62: #{mlp_binary_classifier_forward.1} parent=55 // loop_footer_branch
                %249 = sbr.rel target = $region58
              $region63: #{mlp_binary_classifier_forward.1} parent=55 // loop_exit
                _
            $region56: #{mlp_binary_classifier_forward.1} parent=47 // pred_fallthru
              _
          $region48: #{mlp_binary_classifier_forward.1} parent=43 // pred_fallthru
            _
          %284 = vnop
        $region44: #{mlp_binary_classifier_forward.1} parent=39 // pred_fallthru
          _
      $region40: #{mlp_binary_classifier_forward.1} parent=5 // pred_fallthru
        _
      %p285 = scmp.le.s32.totalorder 1, %s18
      %p286 = scmp.lt.s32.totalorder %s18, 3
      %p287 = pnand %p285, %p286
      %p288 = pneg %p287
      // Predicated region
      $region82: #{mlp_binary_classifier_forward.1} parent=5 // pred_check
        _
      $region83: #{mlp_binary_classifier_forward.1} parent=5 // pred_check_branch
        %290 = sbr.rel (%p287) target = $region85
      $region84: #{mlp_binary_classifier_forward.1} parent=5 // pred_region
        %s291 = ssub.s32 %s18, 1
        %s292 = sand.u32 %s31, 1
        %s293 = sand.u32 %s31, 1
        %s294 = smul.addr %s293, 8
        %s295 = scalar_lea.vmem [#allocation4], %s294
        // Predicated region
        $region86: #{mlp_binary_classifier_forward.1} parent=84 // pred_check
          %p296 = pneg %p44
        $region87: #{mlp_binary_classifier_forward.1} parent=84 // pred_check_branch
          %298 = sbr.rel (%p296) target = $region89
        $region88: #{mlp_binary_classifier_forward.1} parent=84 // pred_region
          _
        $region89: #{mlp_binary_classifier_forward.1} parent=84 // pred_fallthru
          _
        %s299 = sand.u32 %s31, 1
        %s300 = sand.u32 %s31, 1
        %s301 = smul.addr %s300, 8
        %s302 = scalar_lea.vmem [#allocation4], %s301
        %p303 = pneg %p44
        %p304 = pneg %p41
        %p305 = pneg %p65
        %p306 = pneg %p62
        %p307 = pneg %p86
        %p308 = pneg %p83
        %p309 = pneg %p107
        %p310 = pneg %p104
        %p311 = pneg %p128
        %p312 = pneg %p125
        %p313 = pneg %p149
        %p314 = pneg %p146
        %p315 = pneg %p170
        %p316 = pneg %p167
        %p317 = pneg %p196
        %p318 = pneg %p193
        %s319 = sand.u32 %s183, 1
        %s320 = scalar_lea.sflag [#allocation6], %s319
        %s321 = sand.u32 %s183, 1
        %s322 = scalar_lea.vmem [#allocation5], %s321
        %v324 = vld [vmem:[%s1] sm:$0xf]
        %v325 = vld [vmem:[%s1 + $0x4] sm:$0xf]
        %v326 = vld [vmem:[%s1 + $0x8] sm:$0xf]
        %v327 = vld [vmem:[%s1 + $0xc] sm:$0xf]
        %v328 = vld [vmem:[%s1 + $0x10] sm:$0xf]
        %v329 = vld [vmem:[%s1 + $0x14] sm:$0xf]
        %v330 = vld [vmem:[%s1 + $0x18] sm:$0xf]
        %v331 = vld [vmem:[%s1 + $0x1c] sm:$0xf]
        %v332 = vld [vmem:[%s1 + $0x20] sm:$0xf]
        %v333 = vld [vmem:[%s1 + $0x24] sm:$0xf]
        %v334 = vld [vmem:[%s1 + $0x28] sm:$0xf]
        %v335 = vld [vmem:[%s1 + $0x2c] sm:$0xf]
        %v336 = vld [vmem:[%s1 + $0x30] sm:$0xf]
        %v337 = vld [vmem:[%s1 + $0x34] sm:$0xf]
        %v338 = vld [vmem:[%s1 + $0x38] sm:$0xf]
        %v339 = vld [vmem:[%s1 + $0x3c] sm:$0xf]
        %v340 = vld [vmem:[%s295] sm:$0xf]
        %v341 = vld [vmem:[%s295 + $0x4] sm:$0xf]
        %v342 = vld [vmem:[%s2] sm:$0xff]
        %v343 = vld [vmem:[%s2 + $0x8] sm:$0xff]
        %v344 = vld [vmem:[%s2 + $0x10] sm:$0xff]
        %v345 = vld [vmem:[%s2 + $0x18] sm:$0xff]
        %v346 = vld [vmem:[%s2 + $0x20] sm:$0xff]
        %v347 = vld [vmem:[%s2 + $0x28] sm:$0xff]
        %v348 = vld [vmem:[%s2 + $0x30] sm:$0xff]
        %v349 = vld [vmem:[%s2 + $0x38] sm:$0xff]
        %v350 = vld [vmem:[%s2 + $0x40] sm:$0xff]
        %v351 = vld [vmem:[%s2 + $0x48] sm:$0xff]
        %v352 = vld [vmem:[%s2 + $0x50] sm:$0xff]
        %v353 = vld [vmem:[%s2 + $0x58] sm:$0xff]
        %v354 = vld [vmem:[%s2 + $0x60] sm:$0xff]
        %v355 = vld [vmem:[%s2 + $0x68] sm:$0xff]
        %v356 = vld [vmem:[%s2 + $0x70] sm:$0xff]
        %v357 = vld [vmem:[%s2 + $0x78] sm:$0xff]
        %359 = vset.pattern.permute.xlu0 0
        %360 = vperm.xlu0 %359, %v342
        %v361 = vpop.permute.xlu0 %360
        %364 = vset.pattern.permute.xlu0 0
        %365 = vperm.xlu0 %364, %v343
        %v366 = vpop.permute.xlu0 %365
        %369 = vset.pattern.permute.xlu0 0
        %370 = vperm.xlu0 %369, %v344
        %v371 = vpop.permute.xlu0 %370
        %374 = vset.pattern.permute.xlu0 0
        %375 = vperm.xlu0 %374, %v345
        %v376 = vpop.permute.xlu0 %375
        %379 = vset.pattern.permute.xlu0 0
        %380 = vperm.xlu0 %379, %v346
        %v381 = vpop.permute.xlu0 %380
        %384 = vset.pattern.permute.xlu0 0
        %385 = vperm.xlu0 %384, %v347
        %v386 = vpop.permute.xlu0 %385
        %389 = vset.pattern.permute.xlu0 0
        %390 = vperm.xlu0 %389, %v348
        %v391 = vpop.permute.xlu0 %390
        %394 = vset.pattern.permute.xlu0 0
        %395 = vperm.xlu0 %394, %v349
        %v396 = vpop.permute.xlu0 %395
        %399 = vset.pattern.permute.xlu0 0
        %400 = vperm.xlu0 %399, %v350
        %v401 = vpop.permute.xlu0 %400
        %404 = vset.pattern.permute.xlu0 0
        %405 = vperm.xlu0 %404, %v351
        %v406 = vpop.permute.xlu0 %405
        %409 = vset.pattern.permute.xlu0 0
        %410 = vperm.xlu0 %409, %v352
        %v411 = vpop.permute.xlu0 %410
        %414 = vset.pattern.permute.xlu0 0
        %415 = vperm.xlu0 %414, %v353
        %v416 = vpop.permute.xlu0 %415
        %419 = vset.pattern.permute.xlu0 0
        %420 = vperm.xlu0 %419, %v354
        %v421 = vpop.permute.xlu0 %420
        %424 = vset.pattern.permute.xlu0 0
        %425 = vperm.xlu0 %424, %v355
        %v426 = vpop.permute.xlu0 %425
        %429 = vset.pattern.permute.xlu0 0
        %430 = vperm.xlu0 %429, %v356
        %v431 = vpop.permute.xlu0 %430
        %434 = vset.pattern.permute.xlu0 0
        %435 = vperm.xlu0 %434, %v357
        %v436 = vpop.permute.xlu0 %435
        %v454 = vunpack.c.l.b16 %v324
        %v455 = vunpack.c.l.b16 %v325
        %v456 = vunpack.c.l.b16 %v326
        %v457 = vunpack.c.l.b16 %v327
        %v458 = vunpack.c.l.b16 %v328
        %v459 = vunpack.c.l.b16 %v329
        %v460 = vunpack.c.l.b16 %v330
        %v461 = vunpack.c.l.b16 %v331
        %v462 = vunpack.c.l.b16 %v332
        %v463 = vunpack.c.l.b16 %v333
        %v464 = vunpack.c.l.b16 %v334
        %v465 = vunpack.c.l.b16 %v335
        %v466 = vunpack.c.l.b16 %v336
        %v467 = vunpack.c.l.b16 %v337
        %v468 = vunpack.c.l.b16 %v338
        %v469 = vunpack.c.l.b16 %v339
        %v470 = vpack.c.b16 %v455, %v454
        %v471 = vpack.c.b16 %v457, %v456
        %v472 = vpack.c.b16 %v459, %v458
        %v473 = vpack.c.b16 %v461, %v460
        %v474 = vpack.c.b16 %v463, %v462
        %v475 = vpack.c.b16 %v465, %v464
        %v476 = vpack.c.b16 %v467, %v466
        %v477 = vpack.c.b16 %v469, %v468
        %v480 = vunpack.c.l.b16 %v340
        %v481 = vunpack.c.l.b16 %v341
        %v482 = vpack.c.b16 %v481, %v480
        %vm484 = vcmask 130048
        %v486 = vsel %vm484, %v470, 0
        %v489 = vsel %vm484, %v471, 0
        %v492 = vsel %vm484, %v472, 0
        %v495 = vsel %vm484, %v473, 0
        %v498 = vsel %vm484, %v474, 0
        %v501 = vsel %vm484, %v475, 0
        %v504 = vsel %vm484, %v476, 0
        %v507 = vsel %vm484, %v477, 0
        %509 = vmatprep.subr.bf16.mxu0 0
        %510 = vmatpush1.bf16.msra.mxu0 %v482
        %511 = vmatprep.subr.bf16.mxu0 0
        %512 = vmatpush1.bf16.msra.mxu0 0
        %513 = vmatprep.subr.bf16.mxu0 0
        %514 = vmatpush1.bf16.msra.mxu0 0
        %515 = vmatprep.subr.bf16.mxu0 0
        %516 = vmatpush1.bf16.msra.mxu0 0
        %517 = vmatprep.subr.bf16.mxu0 0
        %518 = vmatpush1.bf16.msra.mxu0 0
        %519 = vmatprep.subr.bf16.mxu0 0
        %520 = vmatpush1.bf16.msra.mxu0 0
        %521 = vmatprep.subr.bf16.mxu0 0
        %522 = vmatpush1.bf16.msra.mxu0 0
        %523 = vmatprep.subr.bf16.mxu0 0
        %524 = vmatpush1.bf16.msra.mxu0 0
        %525 = vmatprep.subr.bf16.mxu0 0
        %526 = vmatpush1.bf16.msra.mxu0 0
        %527 = vmatprep.subr.bf16.mxu0 0
        %528 = vmatpush1.bf16.msra.mxu0 0
        %529 = vmatprep.subr.bf16.mxu0 0
        %530 = vmatpush1.bf16.msra.mxu0 0
        %531 = vmatprep.subr.bf16.mxu0 0
        %532 = vmatpush1.bf16.msra.mxu0 0
        %533 = vmatprep.subr.bf16.mxu0 0
        %534 = vmatpush1.bf16.msra.mxu0 0
        %535 = vmatprep.subr.bf16.mxu0 0
        %536 = vmatpush1.bf16.msra.mxu0 0
        %537 = vmatprep.subr.bf16.mxu0 0
        %538 = vmatpush1.bf16.msra.mxu0 0
        %539 = vmatprep.subr.bf16.mxu0 0
        %540 = vmatpush1.bf16.msra.mxu0 0
        %541 = vmatprep.mubr.bf16.mxu0 0
        %542 = vmatmul.mubr.bf16.gmra.mrb[0].mxu0 %v486
        %v543 = vpop.f32.mrb[0].mxu0
        %v544 = vadd.f32 %v361, %v543
        %v545 = vpop.f32.mrb[0].mxu0
        %v546 = vpop.f32.mrb[0].mxu0
        %v547 = vadd.f32 %v366, %v546
        %v548 = vpop.f32.mrb[0].mxu0
        %549 = vmatprep.mubr.bf16.mxu0 0
        %550 = vmatmul.mubr.bf16.gmra.mrb[0].mxu0 %v489
        %v551 = vpop.f32.mrb[0].mxu0
        %v552 = vadd.f32 %v371, %v551
        %v553 = vpop.f32.mrb[0].mxu0
        %v554 = vpop.f32.mrb[0].mxu0
        %v555 = vadd.f32 %v376, %v554
        %v556 = vpop.f32.mrb[0].mxu0
        %557 = vmatprep.mubr.bf16.mxu0 0
        %558 = vmatmul.mubr.bf16.gmra.mrb[0].mxu0 %v492
        %v559 = vpop.f32.mrb[0].mxu0
        %v560 = vadd.f32 %v381, %v559
        %v561 = vpop.f32.mrb[0].mxu0
        %v562 = vpop.f32.mrb[0].mxu0
        %v563 = vadd.f32 %v386, %v562
        %v564 = vpop.f32.mrb[0].mxu0
        %565 = vmatprep.mubr.bf16.mxu0 0
        %566 = vmatmul.mubr.bf16.gmra.mrb[0].mxu0 %v495
        %v567 = vpop.f32.mrb[0].mxu0
        %v568 = vadd.f32 %v391, %v567
        %v569 = vpop.f32.mrb[0].mxu0
        %v570 = vpop.f32.mrb[0].mxu0
        %v571 = vadd.f32 %v396, %v570
        %v572 = vpop.f32.mrb[0].mxu0
        %573 = vmatprep.mubr.bf16.mxu0 0
        %574 = vmatmul.mubr.bf16.gmra.mrb[0].mxu0 %v498
        %v575 = vpop.f32.mrb[0].mxu0
        %v576 = vadd.f32 %v401, %v575
        %v577 = vpop.f32.mrb[0].mxu0
        %v578 = vpop.f32.mrb[0].mxu0
        %v579 = vadd.f32 %v406, %v578
        %v580 = vpop.f32.mrb[0].mxu0
        %581 = vmatprep.mubr.bf16.mxu0 0
        %582 = vmatmul.mubr.bf16.gmra.mrb[0].mxu0 %v501
        %v583 = vpop.f32.mrb[0].mxu0
        %v584 = vadd.f32 %v411, %v583
        %v585 = vpop.f32.mrb[0].mxu0
        %v586 = vpop.f32.mrb[0].mxu0
        %v587 = vadd.f32 %v416, %v586
        %v588 = vpop.f32.mrb[0].mxu0
        %589 = vmatprep.mubr.bf16.mxu0 0
        %590 = vmatmul.mubr.bf16.gmra.mrb[0].mxu0 %v504
        %v591 = vpop.f32.mrb[0].mxu0
        %v592 = vadd.f32 %v421, %v591
        %v593 = vpop.f32.mrb[0].mxu0
        %v594 = vpop.f32.mrb[0].mxu0
        %v595 = vadd.f32 %v426, %v594
        %v596 = vpop.f32.mrb[0].mxu0
        %597 = vmatprep.mubr.bf16.mxu0 0
        %598 = vmatmul.mubr.bf16.gmra.mrb[0].mxu0 %v507
        %v599 = vpop.f32.mrb[0].mxu0
        %v600 = vadd.f32 %v431, %v599
        %v601 = vpop.f32.mrb[0].mxu0
        %v602 = vpop.f32.mrb[0].mxu0
        %v603 = vadd.f32 %v436, %v602
        %v604 = vpop.f32.mrb[0].mxu0
        %605 = vdwg.mxu0
        %v606 = vmax.f32 %v544, 0.0
        %v607 = vmax.f32 %v547, 0.0
        %v608 = vmax.f32 %v552, 0.0
        %v609 = vmax.f32 %v555, 0.0
        %v610 = vmax.f32 %v560, 0.0
        %v611 = vmax.f32 %v563, 0.0
        %v612 = vmax.f32 %v568, 0.0
        %v613 = vmax.f32 %v571, 0.0
        %v614 = vmax.f32 %v576, 0.0
        %v615 = vmax.f32 %v579, 0.0
        %v616 = vmax.f32 %v584, 0.0
        %v617 = vmax.f32 %v587, 0.0
        %v618 = vmax.f32 %v592, 0.0
        %v619 = vmax.f32 %v595, 0.0
        %v620 = vmax.f32 %v600, 0.0
        %v621 = vmax.f32 %v603, 0.0
        %v622 = vpack.c.bf16 %v607, %v606
        %v623 = vpack.c.bf16 %v609, %v608
        %v624 = vpack.c.bf16 %v611, %v610
        %v625 = vpack.c.bf16 %v613, %v612
        %v626 = vpack.c.bf16 %v615, %v614
        %v627 = vpack.c.bf16 %v617, %v616
        %v628 = vpack.c.bf16 %v619, %v618
        %v629 = vpack.c.bf16 %v621, %v620
        %630 = vst [vmem:[#allocation2] sm:$0xff] %v622
        %631 = vst [vmem:[#allocation2 + $0x8] sm:$0xff] %v623
        %632 = vst [vmem:[#allocation2 + $0x10] sm:$0xff] %v624
        %633 = vst [vmem:[#allocation2 + $0x18] sm:$0xff] %v625
        %634 = vst [vmem:[#allocation2 + $0x20] sm:$0xff] %v626
        %635 = vst [vmem:[#allocation2 + $0x28] sm:$0xff] %v627
        %636 = vst [vmem:[#allocation2 + $0x30] sm:$0xff] %v628
        %637 = vst [vmem:[#allocation2 + $0x38] sm:$0xff] %v629
        %v638 = vld [vmem:[%s3] sm:$0xf]
        %v639 = vld [vmem:[%s3 + $0x4] sm:$0xf]
        %v640 = vld [vmem:[%s3 + $0x8] sm:$0xf]
        %v641 = vld [vmem:[%s3 + $0xc] sm:$0xf]
        %v642 = vld [vmem:[%s3 + $0x10] sm:$0xf]
        %v643 = vld [vmem:[%s3 + $0x14] sm:$0xf]
        %v644 = vld [vmem:[%s3 + $0x18] sm:$0xf]
        %v645 = vld [vmem:[%s3 + $0x1c] sm:$0xf]
        %v646 = vld [vmem:[%s3 + $0x20] sm:$0xf]
        %v647 = vld [vmem:[%s3 + $0x24] sm:$0xf]
        %v648 = vld [vmem:[%s3 + $0x28] sm:$0xf]
        %v649 = vld [vmem:[%s3 + $0x2c] sm:$0xf]
        %v650 = vld [vmem:[%s3 + $0x30] sm:$0xf]
        %v651 = vld [vmem:[%s3 + $0x34] sm:$0xf]
        %v652 = vld [vmem:[%s3 + $0x38] sm:$0xf]
        %v653 = vld [vmem:[%s3 + $0x3c] sm:$0xf]
        %v654 = vld [vmem:[#allocation2] sm:$0xff]
        %v655 = vld [vmem:[#allocation2 + $0x8] sm:$0xff]
        %v656 = vld [vmem:[#allocation2 + $0x10] sm:$0xff]
        %v657 = vld [vmem:[#allocation2 + $0x18] sm:$0xff]
        %v658 = vld [vmem:[#allocation2 + $0x20] sm:$0xff]
        %v659 = vld [vmem:[#allocation2 + $0x28] sm:$0xff]
        %v660 = vld [vmem:[#allocation2 + $0x30] sm:$0xff]
        %v661 = vld [vmem:[#allocation2 + $0x38] sm:$0xff]
        %v662 = vld [vmem:[%s4] sm:$0xff]
        %v663 = vld [vmem:[%s4 + $0x8] sm:$0xff]
        %v664 = vld [vmem:[%s4 + $0x10] sm:$0xff]
        %v665 = vld [vmem:[%s4 + $0x18] sm:$0xff]
        %v666 = vld [vmem:[%s4 + $0x20] sm:$0xff]
        %v667 = vld [vmem:[%s4 + $0x28] sm:$0xff]
        %v668 = vld [vmem:[%s4 + $0x30] sm:$0xff]
        %v669 = vld [vmem:[%s4 + $0x38] sm:$0xff]
        %v670 = vld [vmem:[%s4 + $0x40] sm:$0xff]
        %v671 = vld [vmem:[%s4 + $0x48] sm:$0xff]
        %v672 = vld [vmem:[%s4 + $0x50] sm:$0xff]
        %v673 = vld [vmem:[%s4 + $0x58] sm:$0xff]
        %v674 = vld [vmem:[%s4 + $0x60] sm:$0xff]
        %v675 = vld [vmem:[%s4 + $0x68] sm:$0xff]
        %v676 = vld [vmem:[%s4 + $0x70] sm:$0xff]
        %v677 = vld [vmem:[%s4 + $0x78] sm:$0xff]
        %679 = vset.pattern.permute.xlu0 0
        %680 = vperm.xlu0 %679, %v662
        %v681 = vpop.permute.xlu0 %680
        %684 = vset.pattern.permute.xlu0 0
        %685 = vperm.xlu0 %684, %v663
        %v686 = vpop.permute.xlu0 %685
        %689 = vset.pattern.permute.xlu0 0
        %690 = vperm.xlu0 %689, %v664
        %v691 = vpop.permute.xlu0 %690
        %694 = vset.pattern.permute.xlu0 0
        %695 = vperm.xlu0 %694, %v665
        %v696 = vpop.permute.xlu0 %695
        %699 = vset.pattern.permute.xlu0 0
        %700 = vperm.xlu0 %699, %v666
        %v701 = vpop.permute.xlu0 %700
        %704 = vset.pattern.permute.xlu0 0
        %705 = vperm.xlu0 %704, %v667
        %v706 = vpop.permute.xlu0 %705
        %709 = vset.pattern.permute.xlu0 0
        %710 = vperm.xlu0 %709, %v668
        %v711 = vpop.permute.xlu0 %710
        %714 = vset.pattern.permute.xlu0 0
        %715 = vperm.xlu0 %714, %v669
        %v716 = vpop.permute.xlu0 %715
        %719 = vset.pattern.permute.xlu0 0
        %720 = vperm.xlu0 %719, %v670
        %v721 = vpop.permute.xlu0 %720
        %724 = vset.pattern.permute.xlu0 0
        %725 = vperm.xlu0 %724, %v671
        %v726 = vpop.permute.xlu0 %725
        %729 = vset.pattern.permute.xlu0 0
        %730 = vperm.xlu0 %729, %v672
        %v731 = vpop.permute.xlu0 %730
        %734 = vset.pattern.permute.xlu0 0
        %735 = vperm.xlu0 %734, %v673
        %v736 = vpop.permute.xlu0 %735
        %739 = vset.pattern.permute.xlu0 0
        %740 = vperm.xlu0 %739, %v674
        %v741 = vpop.permute.xlu0 %740
        %744 = vset.pattern.permute.xlu0 0
        %745 = vperm.xlu0 %744, %v675
        %v746 = vpop.permute.xlu0 %745
        %749 = vset.pattern.permute.xlu0 0
        %750 = vperm.xlu0 %749, %v676
        %v751 = vpop.permute.xlu0 %750
        %754 = vset.pattern.permute.xlu0 0
        %755 = vperm.xlu0 %754, %v677
        %v756 = vpop.permute.xlu0 %755
        %v774 = vunpack.c.l.b16 %v638
        %v775 = vunpack.c.l.b16 %v639
        %v776 = vunpack.c.l.b16 %v640
        %v777 = vunpack.c.l.b16 %v641
        %v778 = vunpack.c.l.b16 %v642
        %v779 = vunpack.c.l.b16 %v643
        %v780 = vunpack.c.l.b16 %v644
        %v781 = vunpack.c.l.b16 %v645
        %v782 = vunpack.c.l.b16 %v646
        %v783 = vunpack.c.l.b16 %v647
        %v784 = vunpack.c.l.b16 %v648
        %v785 = vunpack.c.l.b16 %v649
        %v786 = vunpack.c.l.b16 %v650
        %v787 = vunpack.c.l.b16 %v651
        %v788 = vunpack.c.l.b16 %v652
        %v789 = vunpack.c.l.b16 %v653
        %v790 = vpack.c.b16 %v775, %v774
        %v791 = vpack.c.b16 %v777, %v776
        %v792 = vpack.c.b16 %v779, %v778
        %v793 = vpack.c.b16 %v781, %v780
        %v794 = vpack.c.b16 %v783, %v782
        %v795 = vpack.c.b16 %v785, %v784
        %v796 = vpack.c.b16 %v787, %v786
        %v797 = vpack.c.b16 %v789, %v788
        %806 = vmatprep.subr.bf16.mxu0 0
        %807 = vmatpush1.bf16.msra.mxu0 %v654
        %808 = vmatprep.subr.bf16.mxu0 0
        %809 = vmatpush1.bf16.msra.mxu0 %v655
        %810 = vmatprep.subr.bf16.mxu0 0
        %811 = vmatpush1.bf16.msra.mxu0 %v656
        %812 = vmatprep.subr.bf16.mxu0 0
        %813 = vmatpush1.bf16.msra.mxu0 %v657
        %814 = vmatprep.subr.bf16.mxu0 0
        %815 = vmatpush1.bf16.msra.mxu0 %v658
        %816 = vmatprep.subr.bf16.mxu0 0
        %817 = vmatpush1.bf16.msra.mxu0 %v659
        %818 = vmatprep.subr.bf16.mxu0 0
        %819 = vmatpush1.bf16.msra.mxu0 %v660
        %820 = vmatprep.subr.bf16.mxu0 0
        %821 = vmatpush1.bf16.msra.mxu0 %v661
        %822 = vmatprep.subr.bf16.mxu0 0
        %823 = vmatpush1.bf16.msra.mxu0 0
        %824 = vmatprep.subr.bf16.mxu0 0
        %825 = vmatpush1.bf16.msra.mxu0 0
        %826 = vmatprep.subr.bf16.mxu0 0
        %827 = vmatpush1.bf16.msra.mxu0 0
        %828 = vmatprep.subr.bf16.mxu0 0
        %829 = vmatpush1.bf16.msra.mxu0 0
        %830 = vmatprep.subr.bf16.mxu0 0
        %831 = vmatpush1.bf16.msra.mxu0 0
        %832 = vmatprep.subr.bf16.mxu0 0
        %833 = vmatpush1.bf16.msra.mxu0 0
        %834 = vmatprep.subr.bf16.mxu0 0
        %835 = vmatpush1.bf16.msra.mxu0 0
        %836 = vmatprep.subr.bf16.mxu0 0
        %837 = vmatpush1.bf16.msra.mxu0 0
        %838 = vmatprep.mubr.bf16.mxu0 0
        %839 = vmatmul.mubr.bf16.gmra.mrb[0].mxu0 %v790
        %v840 = vpop.f32.mrb[0].mxu0
        %v841 = vadd.f32 %v681, %v840
        %v842 = vpop.f32.mrb[0].mxu0
        %v843 = vpop.f32.mrb[0].mxu0
        %v844 = vadd.f32 %v686, %v843
        %v845 = vpop.f32.mrb[0].mxu0
        %846 = vmatprep.mubr.bf16.mxu0 0
        %847 = vmatmul.mubr.bf16.gmra.mrb[0].mxu0 %v791
        %v848 = vpop.f32.mrb[0].mxu0
        %v849 = vadd.f32 %v691, %v848
        %v850 = vpop.f32.mrb[0].mxu0
        %v851 = vpop.f32.mrb[0].mxu0
        %v852 = vadd.f32 %v696, %v851
        %v853 = vpop.f32.mrb[0].mxu0
        %854 = vmatprep.mubr.bf16.mxu0 0
        %855 = vmatmul.mubr.bf16.gmra.mrb[0].mxu0 %v792
        %v856 = vpop.f32.mrb[0].mxu0
        %v857 = vadd.f32 %v701, %v856
        %v858 = vpop.f32.mrb[0].mxu0
        %v859 = vpop.f32.mrb[0].mxu0
        %v860 = vadd.f32 %v706, %v859
        %v861 = vpop.f32.mrb[0].mxu0
        %862 = vmatprep.mubr.bf16.mxu0 0
        %863 = vmatmul.mubr.bf16.gmra.mrb[0].mxu0 %v793
        %v864 = vpop.f32.mrb[0].mxu0
        %v865 = vadd.f32 %v711, %v864
        %v866 = vpop.f32.mrb[0].mxu0
        %v867 = vpop.f32.mrb[0].mxu0
        %v868 = vadd.f32 %v716, %v867
        %v869 = vpop.f32.mrb[0].mxu0
        %870 = vmatprep.mubr.bf16.mxu0 0
        %871 = vmatmul.mubr.bf16.gmra.mrb[0].mxu0 %v794
        %v872 = vpop.f32.mrb[0].mxu0
        %v873 = vadd.f32 %v721, %v872
        %v874 = vpop.f32.mrb[0].mxu0
        %v875 = vpop.f32.mrb[0].mxu0
        %v876 = vadd.f32 %v726, %v875
        %v877 = vpop.f32.mrb[0].mxu0
        %878 = vmatprep.mubr.bf16.mxu0 0
        %879 = vmatmul.mubr.bf16.gmra.mrb[0].mxu0 %v795
        %v880 = vpop.f32.mrb[0].mxu0
        %v881 = vadd.f32 %v731, %v880
        %v882 = vpop.f32.mrb[0].mxu0
        %v883 = vpop.f32.mrb[0].mxu0
        %v884 = vadd.f32 %v736, %v883
        %v885 = vpop.f32.mrb[0].mxu0
        %886 = vmatprep.mubr.bf16.mxu0 0
        %887 = vmatmul.mubr.bf16.gmra.mrb[0].mxu0 %v796
        %v888 = vpop.f32.mrb[0].mxu0
        %v889 = vadd.f32 %v741, %v888
        %v890 = vpop.f32.mrb[0].mxu0
        %v891 = vpop.f32.mrb[0].mxu0
        %v892 = vadd.f32 %v746, %v891
        %v893 = vpop.f32.mrb[0].mxu0
        %894 = vmatprep.mubr.bf16.mxu0 0
        %895 = vmatmul.mubr.bf16.gmra.mrb[0].mxu0 %v797
        %v896 = vpop.f32.mrb[0].mxu0
        %v897 = vadd.f32 %v751, %v896
        %v898 = vpop.f32.mrb[0].mxu0
        %v899 = vpop.f32.mrb[0].mxu0
        %v900 = vadd.f32 %v756, %v899
        %v901 = vpop.f32.mrb[0].mxu0
        %902 = vdwg.mxu0
        %v903 = vmax.f32 %v841, 0.0
        %v904 = vmax.f32 %v844, 0.0
        %v905 = vmax.f32 %v849, 0.0
        %v906 = vmax.f32 %v852, 0.0
        %v907 = vmax.f32 %v857, 0.0
        %v908 = vmax.f32 %v860, 0.0
        %v909 = vmax.f32 %v865, 0.0
        %v910 = vmax.f32 %v868, 0.0
        %v911 = vmax.f32 %v873, 0.0
        %v912 = vmax.f32 %v876, 0.0
        %v913 = vmax.f32 %v881, 0.0
        %v914 = vmax.f32 %v884, 0.0
        %v915 = vmax.f32 %v889, 0.0
        %v916 = vmax.f32 %v892, 0.0
        %v917 = vmax.f32 %v897, 0.0
        %v918 = vmax.f32 %v900, 0.0
        %v919 = vpack.c.bf16 %v904, %v903
        %v920 = vpack.c.bf16 %v906, %v905
        %v921 = vpack.c.bf16 %v908, %v907
        %v922 = vpack.c.bf16 %v910, %v909
        %v923 = vpack.c.bf16 %v912, %v911
        %v924 = vpack.c.bf16 %v914, %v913
        %v925 = vpack.c.bf16 %v916, %v915
        %v926 = vpack.c.bf16 %v918, %v917
        %927 = vst [vmem:[#allocation2] sm:$0xff] %v919
        %928 = vst [vmem:[#allocation2 + $0x8] sm:$0xff] %v920
        %929 = vst [vmem:[#allocation2 + $0x10] sm:$0xff] %v921
        %930 = vst [vmem:[#allocation2 + $0x18] sm:$0xff] %v922
        %931 = vst [vmem:[#allocation2 + $0x20] sm:$0xff] %v923
        %932 = vst [vmem:[#allocation2 + $0x28] sm:$0xff] %v924
        %933 = vst [vmem:[#allocation2 + $0x30] sm:$0xff] %v925
        %934 = vst [vmem:[#allocation2 + $0x38] sm:$0xff] %v926
        %s935 = scalar_lea.vmem %s3, 64
        %v936 = vld [vmem:[%s935] sm:$0xf]
        %v937 = vld [vmem:[%s935 + $0x4] sm:$0xf]
        %v938 = vld [vmem:[%s935 + $0x8] sm:$0xf]
        %v939 = vld [vmem:[%s935 + $0xc] sm:$0xf]
        %v940 = vld [vmem:[%s935 + $0x10] sm:$0xf]
        %v941 = vld [vmem:[%s935 + $0x14] sm:$0xf]
        %v942 = vld [vmem:[%s935 + $0x18] sm:$0xf]
        %v943 = vld [vmem:[%s935 + $0x1c] sm:$0xf]
        %v944 = vld [vmem:[%s935 + $0x20] sm:$0xf]
        %v945 = vld [vmem:[%s935 + $0x24] sm:$0xf]
        %v946 = vld [vmem:[%s935 + $0x28] sm:$0xf]
        %v947 = vld [vmem:[%s935 + $0x2c] sm:$0xf]
        %v948 = vld [vmem:[%s935 + $0x30] sm:$0xf]
        %v949 = vld [vmem:[%s935 + $0x34] sm:$0xf]
        %v950 = vld [vmem:[%s935 + $0x38] sm:$0xf]
        %v951 = vld [vmem:[%s935 + $0x3c] sm:$0xf]
        %v952 = vld [vmem:[#allocation2] sm:$0xff]
        %v953 = vld [vmem:[#allocation2 + $0x8] sm:$0xff]
        %v954 = vld [vmem:[#allocation2 + $0x10] sm:$0xff]
        %v955 = vld [vmem:[#allocation2 + $0x18] sm:$0xff]
        %v956 = vld [vmem:[#allocation2 + $0x20] sm:$0xff]
        %v957 = vld [vmem:[#allocation2 + $0x28] sm:$0xff]
        %v958 = vld [vmem:[#allocation2 + $0x30] sm:$0xff]
        %v959 = vld [vmem:[#allocation2 + $0x38] sm:$0xff]
        %s960 = scalar_lea.vmem %s4, 128
        %v961 = vld [vmem:[%s960] sm:$0xff]
        %v962 = vld [vmem:[%s960 + $0x8] sm:$0xff]
        %v963 = vld [vmem:[%s960 + $0x10] sm:$0xff]
        %v964 = vld [vmem:[%s960 + $0x18] sm:$0xff]
        %v965 = vld [vmem:[%s960 + $0x20] sm:$0xff]
        %v966 = vld [vmem:[%s960 + $0x28] sm:$0xff]
        %v967 = vld [vmem:[%s960 + $0x30] sm:$0xff]
        %v968 = vld [vmem:[%s960 + $0x38] sm:$0xff]
        %v969 = vld [vmem:[%s960 + $0x40] sm:$0xff]
        %v970 = vld [vmem:[%s960 + $0x48] sm:$0xff]
        %v971 = vld [vmem:[%s960 + $0x50] sm:$0xff]
        %v972 = vld [vmem:[%s960 + $0x58] sm:$0xff]
        %v973 = vld [vmem:[%s960 + $0x60] sm:$0xff]
        %v974 = vld [vmem:[%s960 + $0x68] sm:$0xff]
        %v975 = vld [vmem:[%s960 + $0x70] sm:$0xff]
        %v976 = vld [vmem:[%s960 + $0x78] sm:$0xff]
        %978 = vset.pattern.permute.xlu0 0
        %979 = vperm.xlu0 %978, %v961
        %v980 = vpop.permute.xlu0 %979
        %983 = vset.pattern.permute.xlu0 0
        %984 = vperm.xlu0 %983, %v962
        %v985 = vpop.permute.xlu0 %984
        %988 = vset.pattern.permute.xlu0 0
        %989 = vperm.xlu0 %988, %v963
        %v990 = vpop.permute.xlu0 %989
        %993 = vset.pattern.permute.xlu0 0
        %994 = vperm.xlu0 %993, %v964
        %v995 = vpop.permute.xlu0 %994
        %998 = vset.pattern.permute.xlu0 0
        %999 = vperm.xlu0 %998, %v965
        %v1000 = vpop.permute.xlu0 %999
        %1003 = vset.pattern.permute.xlu0 0
        %1004 = vperm.xlu0 %1003, %v966
        %v1005 = vpop.permute.xlu0 %1004
        %1008 = vset.pattern.permute.xlu0 0
        %1009 = vperm.xlu0 %1008, %v967
        %v1010 = vpop.permute.xlu0 %1009
        %1013 = vset.pattern.permute.xlu0 0
        %1014 = vperm.xlu0 %1013, %v968
        %v1015 = vpop.permute.xlu0 %1014
        %1018 = vset.pattern.permute.xlu0 0
        %1019 = vperm.xlu0 %1018, %v969
        %v1020 = vpop.permute.xlu0 %1019
        %1023 = vset.pattern.permute.xlu0 0
        %1024 = vperm.xlu0 %1023, %v970
        %v1025 = vpop.permute.xlu0 %1024
        %1028 = vset.pattern.permute.xlu0 0
        %1029 = vperm.xlu0 %1028, %v971
        %v1030 = vpop.permute.xlu0 %1029
        %1033 = vset.pattern.permute.xlu0 0
        %1034 = vperm.xlu0 %1033, %v972
        %v1035 = vpop.permute.xlu0 %1034
        %1038 = vset.pattern.permute.xlu0 0
        %1039 = vperm.xlu0 %1038, %v973
        %v1040 = vpop.permute.xlu0 %1039
        %1043 = vset.pattern.permute.xlu0 0
        %1044 = vperm.xlu0 %1043, %v974
        %v1045 = vpop.permute.xlu0 %1044
        %1048 = vset.pattern.permute.xlu0 0
        %1049 = vperm.xlu0 %1048, %v975
        %v1050 = vpop.permute.xlu0 %1049
        %1053 = vset.pattern.permute.xlu0 0
        %1054 = vperm.xlu0 %1053, %v976
        %v1055 = vpop.permute.xlu0 %1054
        %v1073 = vunpack.c.l.b16 %v936
        %v1074 = vunpack.c.l.b16 %v937
        %v1075 = vunpack.c.l.b16 %v938
        %v1076 = vunpack.c.l.b16 %v939
        %v1077 = vunpack.c.l.b16 %v940
        %v1078 = vunpack.c.l.b16 %v941
        %v1079 = vunpack.c.l.b16 %v942
        %v1080 = vunpack.c.l.b16 %v943
        %v1081 = vunpack.c.l.b16 %v944
        %v1082 = vunpack.c.l.b16 %v945
        %v1083 = vunpack.c.l.b16 %v946
        %v1084 = vunpack.c.l.b16 %v947
        %v1085 = vunpack.c.l.b16 %v948
        %v1086 = vunpack.c.l.b16 %v949
        %v1087 = vunpack.c.l.b16 %v950
        %v1088 = vunpack.c.l.b16 %v951
        %v1089 = vpack.c.b16 %v1074, %v1073
        %v1090 = vpack.c.b16 %v1076, %v1075
        %v1091 = vpack.c.b16 %v1078, %v1077
        %v1092 = vpack.c.b16 %v1080, %v1079
        %v1093 = vpack.c.b16 %v1082, %v1081
        %v1094 = vpack.c.b16 %v1084, %v1083
        %v1095 = vpack.c.b16 %v1086, %v1085
        %v1096 = vpack.c.b16 %v1088, %v1087
        %1105 = vmatprep.subr.bf16.mxu0 0
        %1106 = vmatpush1.bf16.msra.mxu0 %v952
        %1107 = vmatprep.subr.bf16.mxu0 0
        %1108 = vmatpush1.bf16.msra.mxu0 %v953
        %1109 = vmatprep.subr.bf16.mxu0 0
        %1110 = vmatpush1.bf16.msra.mxu0 %v954
        %1111 = vmatprep.subr.bf16.mxu0 0
        %1112 = vmatpush1.bf16.msra.mxu0 %v955
        %1113 = vmatprep.subr.bf16.mxu0 0
        %1114 = vmatpush1.bf16.msra.mxu0 %v956
        %1115 = vmatprep.subr.bf16.mxu0 0
        %1116 = vmatpush1.bf16.msra.mxu0 %v957
        %1117 = vmatprep.subr.bf16.mxu0 0
        %1118 = vmatpush1.bf16.msra.mxu0 %v958
        %1119 = vmatprep.subr.bf16.mxu0 0
        %1120 = vmatpush1.bf16.msra.mxu0 %v959
        %1121 = vmatprep.subr.bf16.mxu0 0
        %1122 = vmatpush1.bf16.msra.mxu0 0
        %1123 = vmatprep.subr.bf16.mxu0 0
        %1124 = vmatpush1.bf16.msra.mxu0 0
        %1125 = vmatprep.subr.bf16.mxu0 0
        %1126 = vmatpush1.bf16.msra.mxu0 0
        %1127 = vmatprep.subr.bf16.mxu0 0
        %1128 = vmatpush1.bf16.msra.mxu0 0
        %1129 = vmatprep.subr.bf16.mxu0 0
        %1130 = vmatpush1.bf16.msra.mxu0 0
        %1131 = vmatprep.subr.bf16.mxu0 0
        %1132 = vmatpush1.bf16.msra.mxu0 0
        %1133 = vmatprep.subr.bf16.mxu0 0
        %1134 = vmatpush1.bf16.msra.mxu0 0
        %1135 = vmatprep.subr.bf16.mxu0 0
        %1136 = vmatpush1.bf16.msra.mxu0 0
        %1137 = vmatprep.mubr.bf16.mxu0 0
        %1138 = vmatmul.mubr.bf16.gmra.mrb[0].mxu0 %v1089
        %v1139 = vpop.f32.mrb[0].mxu0
        %v1140 = vadd.f32 %v980, %v1139
        %v1141 = vpop.f32.mrb[0].mxu0
        %v1142 = vpop.f32.mrb[0].mxu0
        %v1143 = vadd.f32 %v985, %v1142
        %v1144 = vpop.f32.mrb[0].mxu0
        %1145 = vmatprep.mubr.bf16.mxu0 0
        %1146 = vmatmul.mubr.bf16.gmra.mrb[0].mxu0 %v1090
        %v1147 = vpop.f32.mrb[0].mxu0
        %v1148 = vadd.f32 %v990, %v1147
        %v1149 = vpop.f32.mrb[0].mxu0
        %v1150 = vpop.f32.mrb[0].mxu0
        %v1151 = vadd.f32 %v995, %v1150
        %v1152 = vpop.f32.mrb[0].mxu0
        %1153 = vmatprep.mubr.bf16.mxu0 0
        %1154 = vmatmul.mubr.bf16.gmra.mrb[0].mxu0 %v1091
        %v1155 = vpop.f32.mrb[0].mxu0
        %v1156 = vadd.f32 %v1000, %v1155
        %v1157 = vpop.f32.mrb[0].mxu0
        %v1158 = vpop.f32.mrb[0].mxu0
        %v1159 = vadd.f32 %v1005, %v1158
        %v1160 = vpop.f32.mrb[0].mxu0
        %1161 = vmatprep.mubr.bf16.mxu0 0
        %1162 = vmatmul.mubr.bf16.gmra.mrb[0].mxu0 %v1092
        %v1163 = vpop.f32.mrb[0].mxu0
        %v1164 = vadd.f32 %v1010, %v1163
        %v1165 = vpop.f32.mrb[0].mxu0
        %v1166 = vpop.f32.mrb[0].mxu0
        %v1167 = vadd.f32 %v1015, %v1166
        %v1168 = vpop.f32.mrb[0].mxu0
        %1169 = vmatprep.mubr.bf16.mxu0 0
        %1170 = vmatmul.mubr.bf16.gmra.mrb[0].mxu0 %v1093
        %v1171 = vpop.f32.mrb[0].mxu0
        %v1172 = vadd.f32 %v1020, %v1171
        %v1173 = vpop.f32.mrb[0].mxu0
        %v1174 = vpop.f32.mrb[0].mxu0
        %v1175 = vadd.f32 %v1025, %v1174
        %v1176 = vpop.f32.mrb[0].mxu0
        %1177 = vmatprep.mubr.bf16.mxu0 0
        %1178 = vmatmul.mubr.bf16.gmra.mrb[0].mxu0 %v1094
        %v1179 = vpop.f32.mrb[0].mxu0
        %v1180 = vadd.f32 %v1030, %v1179
        %v1181 = vpop.f32.mrb[0].mxu0
        %v1182 = vpop.f32.mrb[0].mxu0
        %v1183 = vadd.f32 %v1035, %v1182
        %v1184 = vpop.f32.mrb[0].mxu0
        %1185 = vmatprep.mubr.bf16.mxu0 0
        %1186 = vmatmul.mubr.bf16.gmra.mrb[0].mxu0 %v1095
        %v1187 = vpop.f32.mrb[0].mxu0
        %v1188 = vadd.f32 %v1040, %v1187
        %v1189 = vpop.f32.mrb[0].mxu0
        %v1190 = vpop.f32.mrb[0].mxu0
        %v1191 = vadd.f32 %v1045, %v1190
        %v1192 = vpop.f32.mrb[0].mxu0
        %1193 = vmatprep.mubr.bf16.mxu0 0
        %1194 = vmatmul.mubr.bf16.gmra.mrb[0].mxu0 %v1096
        %v1195 = vpop.f32.mrb[0].mxu0
        %v1196 = vadd.f32 %v1050, %v1195
        %v1197 = vpop.f32.mrb[0].mxu0
        %v1198 = vpop.f32.mrb[0].mxu0
        %v1199 = vadd.f32 %v1055, %v1198
        %v1200 = vpop.f32.mrb[0].mxu0
        %1201 = vdwg.mxu0
        %v1202 = vmax.f32 %v1140, 0.0
        %v1203 = vmax.f32 %v1143, 0.0
        %v1204 = vmax.f32 %v1148, 0.0
        %v1205 = vmax.f32 %v1151, 0.0
        %v1206 = vmax.f32 %v1156, 0.0
        %v1207 = vmax.f32 %v1159, 0.0
        %v1208 = vmax.f32 %v1164, 0.0
        %v1209 = vmax.f32 %v1167, 0.0
        %v1210 = vmax.f32 %v1172, 0.0
        %v1211 = vmax.f32 %v1175, 0.0
        %v1212 = vmax.f32 %v1180, 0.0
        %v1213 = vmax.f32 %v1183, 0.0
        %v1214 = vmax.f32 %v1188, 0.0
        %v1215 = vmax.f32 %v1191, 0.0
        %v1216 = vmax.f32 %v1196, 0.0
        %v1217 = vmax.f32 %v1199, 0.0
        %v1218 = vpack.c.bf16 %v1203, %v1202
        %v1219 = vpack.c.bf16 %v1205, %v1204
        %v1220 = vpack.c.bf16 %v1207, %v1206
        %v1221 = vpack.c.bf16 %v1209, %v1208
        %v1222 = vpack.c.bf16 %v1211, %v1210
        %v1223 = vpack.c.bf16 %v1213, %v1212
        %v1224 = vpack.c.bf16 %v1215, %v1214
        %v1225 = vpack.c.bf16 %v1217, %v1216
        %1226 = vst [vmem:[#allocation2] sm:$0xff] %v1218
        %1227 = vst [vmem:[#allocation2 + $0x8] sm:$0xff] %v1219
        %1228 = vst [vmem:[#allocation2 + $0x10] sm:$0xff] %v1220
        %1229 = vst [vmem:[#allocation2 + $0x18] sm:$0xff] %v1221
        %1230 = vst [vmem:[#allocation2 + $0x20] sm:$0xff] %v1222
        %1231 = vst [vmem:[#allocation2 + $0x28] sm:$0xff] %v1223
        %1232 = vst [vmem:[#allocation2 + $0x30] sm:$0xff] %v1224
        %1233 = vst [vmem:[#allocation2 + $0x38] sm:$0xff] %v1225
        %v1234 = vld [vmem:[#allocation2] sm:$0xff]
        %v1235 = vld [vmem:[#allocation2 + $0x8] sm:$0xff]
        %v1236 = vld [vmem:[#allocation2 + $0x10] sm:$0xff]
        %v1237 = vld [vmem:[#allocation2 + $0x18] sm:$0xff]
        %v1238 = vld [vmem:[#allocation2 + $0x20] sm:$0xff]
        %v1239 = vld [vmem:[#allocation2 + $0x28] sm:$0xff]
        %v1240 = vld [vmem:[#allocation2 + $0x30] sm:$0xff]
        %v1241 = vld [vmem:[#allocation2 + $0x38] sm:$0xff]
        %v1242 = vunpack.c.l.bf16 %v1234
        %v1243 = vunpack.c.h.bf16 %v1234
        %v1244 = vunpack.c.l.bf16 %v1235
        %v1245 = vunpack.c.h.bf16 %v1235
        %v1246 = vunpack.c.l.bf16 %v1236
        %v1247 = vunpack.c.h.bf16 %v1236
        %v1248 = vunpack.c.l.bf16 %v1237
        %v1249 = vunpack.c.h.bf16 %v1237
        %v1250 = vunpack.c.l.bf16 %v1238
        %v1251 = vunpack.c.h.bf16 %v1238
        %v1252 = vunpack.c.l.bf16 %v1239
        %v1253 = vunpack.c.h.bf16 %v1239
        %v1254 = vunpack.c.l.bf16 %v1240
        %v1255 = vunpack.c.h.bf16 %v1240
        %v1256 = vunpack.c.l.bf16 %v1241
        %v1257 = vunpack.c.h.bf16 %v1241
        %v1258 = vld [vmem:[%s5] sm:$0xff]
        %v1259 = vld [vmem:[%s5 + $0x8] sm:$0xff]
        %v1260 = vld [vmem:[%s5 + $0x10] sm:$0xff]
        %v1261 = vld [vmem:[%s5 + $0x18] sm:$0xff]
        %v1262 = vld [vmem:[%s5 + $0x20] sm:$0xff]
        %v1263 = vld [vmem:[%s5 + $0x28] sm:$0xff]
        %v1264 = vld [vmem:[%s5 + $0x30] sm:$0xff]
        %v1265 = vld [vmem:[%s5 + $0x38] sm:$0xff]
        %v1266 = vld [vmem:[%s5 + $0x40] sm:$0xff]
        %v1267 = vld [vmem:[%s5 + $0x48] sm:$0xff]
        %v1268 = vld [vmem:[%s5 + $0x50] sm:$0xff]
        %v1269 = vld [vmem:[%s5 + $0x58] sm:$0xff]
        %v1270 = vld [vmem:[%s5 + $0x60] sm:$0xff]
        %v1271 = vld [vmem:[%s5 + $0x68] sm:$0xff]
        %v1272 = vld [vmem:[%s5 + $0x70] sm:$0xff]
        %v1273 = vld [vmem:[%s5 + $0x78] sm:$0xff]
        %1275 = vset.pattern.permute.xlu0 0
        %1276 = vperm.xlu0 %1275, %v1258
        %v1277 = vpop.permute.xlu0 %1276
        %1280 = vset.pattern.permute.xlu0 0
        %1281 = vperm.xlu0 %1280, %v1259
        %v1282 = vpop.permute.xlu0 %1281
        %1285 = vset.pattern.permute.xlu0 0
        %1286 = vperm.xlu0 %1285, %v1260
        %v1287 = vpop.permute.xlu0 %1286
        %1290 = vset.pattern.permute.xlu0 0
        %1291 = vperm.xlu0 %1290, %v1261
        %v1292 = vpop.permute.xlu0 %1291
        %1295 = vset.pattern.permute.xlu0 0
        %1296 = vperm.xlu0 %1295, %v1262
        %v1297 = vpop.permute.xlu0 %1296
        %1300 = vset.pattern.permute.xlu0 0
        %1301 = vperm.xlu0 %1300, %v1263
        %v1302 = vpop.permute.xlu0 %1301
        %1305 = vset.pattern.permute.xlu0 0
        %1306 = vperm.xlu0 %1305, %v1264
        %v1307 = vpop.permute.xlu0 %1306
        %1310 = vset.pattern.permute.xlu0 0
        %1311 = vperm.xlu0 %1310, %v1265
        %v1312 = vpop.permute.xlu0 %1311
        %1315 = vset.pattern.permute.xlu0 0
        %1316 = vperm.xlu0 %1315, %v1266
        %v1317 = vpop.permute.xlu0 %1316
        %1320 = vset.pattern.permute.xlu0 0
        %1321 = vperm.xlu0 %1320, %v1267
        %v1322 = vpop.permute.xlu0 %1321
        %1325 = vset.pattern.permute.xlu0 0
        %1326 = vperm.xlu0 %1325, %v1268
        %v1327 = vpop.permute.xlu0 %1326
        %1330 = vset.pattern.permute.xlu0 0
        %1331 = vperm.xlu0 %1330, %v1269
        %v1332 = vpop.permute.xlu0 %1331
        %1335 = vset.pattern.permute.xlu0 0
        %1336 = vperm.xlu0 %1335, %v1270
        %v1337 = vpop.permute.xlu0 %1336
        %1340 = vset.pattern.permute.xlu0 0
        %1341 = vperm.xlu0 %1340, %v1271
        %v1342 = vpop.permute.xlu0 %1341
        %1345 = vset.pattern.permute.xlu0 0
        %1346 = vperm.xlu0 %1345, %v1272
        %v1347 = vpop.permute.xlu0 %1346
        %1350 = vset.pattern.permute.xlu0 0
        %1351 = vperm.xlu0 %1350, %v1273
        %v1352 = vpop.permute.xlu0 %1351
        %v1354 = vmul.f32 %v1242, %v1277
        %v1355 = vmul.f32 %v1243, %v1282
        %v1356 = vmul.f32 %v1244, %v1287
        %v1357 = vmul.f32 %v1245, %v1292
        %v1358 = vmul.f32 %v1246, %v1297
        %v1359 = vmul.f32 %v1247, %v1302
        %v1360 = vmul.f32 %v1248, %v1307
        %v1361 = vmul.f32 %v1249, %v1312
        %v1362 = vmul.f32 %v1250, %v1317
        %v1363 = vmul.f32 %v1251, %v1322
        %v1364 = vmul.f32 %v1252, %v1327
        %v1365 = vmul.f32 %v1253, %v1332
        %v1366 = vmul.f32 %v1254, %v1337
        %v1367 = vmul.f32 %v1255, %v1342
        %v1368 = vmul.f32 %v1256, %v1347
        %v1369 = vmul.f32 %v1257, %v1352
        %v1370 = vadd.f32 %v1354, %v1355
        %v1371 = vadd.f32 %v1370, %v1356
        %v1372 = vadd.f32 %v1371, %v1357
        %v1373 = vadd.f32 %v1372, %v1358
        %v1374 = vadd.f32 %v1373, %v1359
        %v1375 = vadd.f32 %v1374, %v1360
        %v1376 = vadd.f32 %v1375, %v1361
        %v1377 = vadd.f32 %v1376, %v1362
        %v1378 = vadd.f32 %v1377, %v1363
        %v1379 = vadd.f32 %v1378, %v1364
        %v1380 = vadd.f32 %v1379, %v1365
        %v1381 = vadd.f32 %v1380, %v1366
        %v1382 = vadd.f32 %v1381, %v1367
        %v1383 = vadd.f32 %v1382, %v1368
        %v1384 = vadd.f32 %v1383, %v1369
        %v1385 = vrot.slane %v1384, 4
        %v1386 = vadd.f32 %v1384, %v1385
        %v1387 = vrot.slane %v1386, 2
        %v1388 = vadd.f32 %v1386, %v1387
        %v1389 = vrot.slane %v1388, 1
        %v1390 = vadd.f32 %v1388, %v1389
        %v1391 = vld [vmem:[#allocation3] sm:$0x1]
        %1393 = vset.pattern.permute.xlu0 0
        %1394 = vperm.xlu0 %1393, %v1391
        %v1395 = vpop.permute.xlu0 %1394
        %v1397 = vlaneseq
        %v1398 = vshrl.u32 %v1397, 7
        %v1399 = vsub.s32 0, %v1398
        %v1400 = vrot.slane %v1395, %v1399
        %v1401 = vadd.f32 %v1390, %v1400
        %v1402 = vxor.u32 %v1401, 2147483648
        %v1403 = vmul.f32 %v1402, 1.442695
        %v1404 = vpow.pop %v1403
        %v1405 = vadd.f32 %v1404, 1.0
        %v1406 = vrcp.pop %v1405
        %v1407 = vmul.f32 1.0, %v1406
        %1408 = vst [vmem:[%s322] sm:$0x1] %v1407
        %s1409 = sand.u32 %s183, 1
        %s1410 = scalar_lea.sflag [#allocation6], %s1409
        %s1411 = sand.u32 %s183, 1
        %s1412 = scalar_lea.vmem [#allocation5], %s1411
        // Predicated region
        $region90: #{mlp_binary_classifier_forward.1} parent=84 // pred_check
          %p1413 = pneg %p193
        $region91: #{mlp_binary_classifier_forward.1} parent=84 // pred_check_branch
          %1415 = sbr.rel (%p1413) target = $region93
        $region92: #{mlp_binary_classifier_forward.1} parent=84 // pred_region
          %s1417 = ssub.s32 16, 16
          %1418 = vsyncadd %s1410, %s1417
          %s1419 = smul.addr %s23, 16
          %s1420 = scalar_lea.hbm %s7, %s1419
          %s1422 = sshll.u32 %s1412, 4
          %s1423 = int_to_ptr.vmem [resolvable:$true] %s1422
          %1425 = dma.vmem_to_hbm [thread:$0]  %s1423, 16, %s1420, %s1410
        $region93: #{mlp_binary_classifier_forward.1} parent=84 // pred_fallthru
          _
      $region85: #{mlp_binary_classifier_forward.1} parent=5 // pred_fallthru
        _
      %p1426 = scmp.le.s32.totalorder 2, %s18
      // Predicated region
      $region94: #{mlp_binary_classifier_forward.1} parent=5 // pred_check
        %p1427 = pneg %p1426
      $region95: #{mlp_binary_classifier_forward.1} parent=5 // pred_check_branch
        %1429 = sbr.rel (%p1427) target = $region97
      $region96: #{mlp_binary_classifier_forward.1} parent=5 // pred_region
        %s1430 = ssub.s32 %s18, 2
        // Predicated region
        $region98: #{mlp_binary_classifier_forward.1} parent=96 // pred_check
          %p1431 = pneg %p199
        $region99: #{mlp_binary_classifier_forward.1} parent=96 // pred_check_branch
          %1433 = sbr.rel (%p1431) target = $region101
        $region100: #{mlp_binary_classifier_forward.1} parent=96 // pred_region
          %s1434 = sand.u32 %s184, 1
          %s1435 = scalar_lea.sflag [#allocation6], %s1434
          %s1436 = sand.u32 %s184, 1
          %s1437 = scalar_lea.vmem [#allocation5], %s1436
          %1438 = dma.done %s1435, 16
        $region101: #{mlp_binary_classifier_forward.1} parent=96 // pred_fallthru
          _
      $region97: #{mlp_binary_classifier_forward.1} parent=5 // pred_fallthru
        _
    $region6: #{mlp_binary_classifier_forward.1} parent=1 // loop_footer
      %s22 = sadd.s32 1, %s18
    $region7: #{mlp_binary_classifier_forward.1} parent=1 // loop_footer_branch
      %17 = sbr.rel target = $region3
    $region8: #{mlp_binary_classifier_forward.1} parent=1 // loop_exit
      _
    %1439 = vsyncpa [#allocation6], 1
    %s1440 = scalar_lea.sflag [#allocation6], 1
    %1441 = vsyncpa %s1440, 1

</llo_original>
